<compile_context>
chip_gen: v7x
topology: tpu7x:2x2x1
jax: 0.10.0
libtpu: 0.0.40
codegen_flags: <defaults>
</compile_context>

<pallas_src>
import functools

import jax
import jax.numpy as jnp
from jax import lax
from jax.experimental import pallas as pl
from jax.experimental.pallas import tpu as pltpu

F32 = jnp.float32
BF16 = jnp.bfloat16
GEN_EPS = 1e-7   # GENConv message epsilon
GEN_T = 1.0      # GENConv softmax temperature (learn_t init value)
LN_EPS = 1e-5
BN_EPS = 1e-5
NEG_BIG = -1e30
OUT_PAD = 128    # lane-dense padding of the final [G, 1] output
CONV_OUT = 128   # GENConv output width (pooled feature dim)

# packed bias slab layout: (name, true width); each segment is padded to a 128-lane boundary
_BIAS_SEGS = (
    ("b_sd", 256), ("b_m1", 256), ("ln_g", 256), ("ln_b", 256),
    ("b_m2", 128), ("fc1_b", 64), ("fc2_b", 32), ("cx_b", 64),
    ("b11", 128), ("fc12_b", 32), ("out_b", OUT_PAD),
)


def _bias_layout():
    offs, cur = {}, 0
    for name, size in _BIAS_SEGS:
        offs[name] = (cur, size)
        cur += -(-size // 128) * 128          # 128-lane aligned segments (no lane rotates in-kernel)
    return offs, cur


def _vmem():
    return pl.BlockSpec(memory_space=pltpu.MemorySpace.VMEM)


# ------------------------------------------------------------------ fully fused forward kernel
def _fused_forward_kernel(num_graphs, boffs,
                          x_ref, adj_ref, batch_ref, prot_ref,
                          wsd_ref, w1_ref, w2_ref, fc1w_ref, fc2w_ref,
                          cxw_ref, wd_ref, w11p_ref, w12_ref, wo_ref, bias_ref,
                          o_ref, pooled_ref):
    def bias(name):                                               # static lane-aligned slice of the slab
        o, s = boffs[name]
        return bias_ref[:, o:o + s]

    # ---- GENConv(32 -> 128), softmax aggregation; bn1(eval) already folded into w2 / b_m2 ----
    xb = x_ref[...]                                               # bf16
    h_sd = jnp.dot(xb, wsd_ref[...], preferred_element_type=jnp.float32) + bias("b_sd")   # [N, 256]
    cdim = wsd_ref.shape[1] // 2                                  # 128
    h_src = h_sd[:, :cdim]
    h_dst = h_sd[:, cdim:]

    m = jnp.maximum(h_src, 0.0) + GEN_EPS                         # messages [N, C]
    # per-feature stabilizer: cancels exactly in the num/den ratio (edge_attr unused, as in reference)
    c = jnp.max(m, axis=0, keepdims=True)
    e = jnp.exp(GEN_T * (m - c))
    em = jnp.concatenate([e, e * m], axis=-1).astype(BF16)        # [N, 2C] bf16 MXU RHS
    agg2 = jnp.dot(adj_ref[...], em, preferred_element_type=jnp.float32)  # bf16 adj, one MXU pass
    den = agg2[:, :cdim]
    num = agg2[:, cdim:]
    # isolated nodes have num == 0 exactly -> output 0; reciprocal on the EUP slot
    # (approx=True: ~1e-3 rel. error on the softmax normalization; acceptable here)
    agg = num * pl.reciprocal(jnp.maximum(den, 1e-20), approx=True)

    h = agg + h_dst
    # GENConv MLP (num_layers=2, norm='layer'): Linear(C,2C) -> LayerNorm -> ReLU -> Linear(2C,C)
    z = jnp.dot(h.astype(BF16), w1_ref[...], preferred_element_type=jnp.float32) + bias("b_m1")
    mu = jnp.mean(z, axis=-1, keepdims=True)
    var = jnp.maximum(jnp.mean(z * z, axis=-1, keepdims=True) - mu * mu, 0.0)   # single-pass variance
    z = (z - mu) * lax.rsqrt(var + LN_EPS) * bias("ln_g") + bias("ln_b")
    z = jnp.maximum(z, 0.0)
    h = jnp.dot(z.astype(BF16), w2_ref[...], preferred_element_type=jnp.float32) + bias("b_m2")  # [N, 128]

    # ---- global max pool (gmp): constant code size in G, masked 2-D max per graph ----
    def pool_body(g, carry):
        col = batch_ref[...] == g                                 # [N, 1] bool
        sel = jnp.where(col, h, NEG_BIG)                          # [N, 128]
        pooled_ref[pl.ds(g, 1), :] = jnp.max(sel, axis=0, keepdims=True)
        return carry
    lax.fori_loop(0, num_graphs, pool_body, 0)
    pooled = pooled_ref[...]                                      # [G, 128]

    # ---- drug head: fc1+relu -> (bn3 folded) fc2+relu ; dropout(p=0.1) -> identity ----
    d = jnp.maximum(jnp.dot(pooled.astype(BF16), fc1w_ref[...],
                            preferred_element_type=jnp.float32) + bias("fc1_b"), 0.0)
    d = jnp.maximum(jnp.dot(d.astype(BF16), fc2w_ref[...],
                            preferred_element_type=jnp.float32) + bias("fc2_b"), 0.0)   # [G, 32]

    # ---- protein branch: Conv1d(32->63, k=1) padded to 64 == matmul, ReLU; MaxPool1d(k=1) == id ----
    pr = jnp.maximum(jnp.dot(prot_ref[...], cxw_ref[...],
                             preferred_element_type=jnp.float32) + bias("cx_b"), 0.0)   # [G, 64]

    # ---- out head: fc3 & fc11 pre-folded (wd = fc3_w @ w11_drug), then fc12+relu, then out ----
    h11 = (jnp.dot(d.astype(BF16), wd_ref[...], preferred_element_type=jnp.float32)
           + jnp.dot(pr.astype(BF16), w11p_ref[...], preferred_element_type=jnp.float32)
           + bias("b11"))
    h12 = jnp.maximum(jnp.dot(h11.astype(BF16), w12_ref[...],
                              preferred_element_type=jnp.float32) + bias("fc12_b"), 0.0)
    o_ref[...] = (jnp.dot(h12.astype(BF16), wo_ref[...],
                          preferred_element_type=jnp.float32)
                  + bias("out_b")).astype(o_ref.dtype)            # lane-dense [G, 128] store


# ------------------------------------------------------------------ full forward (host glue + 1 kernel)
def gat_gcn_forward(params, proteins, edge_index, edge_attr, x, batch, num_graphs):
    del edge_attr  # reference forward encodes edge_attr but never consumes it -> dead compute dropped
    n = x.shape[0]
    p = params

    # ---- BN folds ----
    g1, b1, rm1, rv1 = p["bn1"]
    s1 = g1 / jnp.sqrt(rv1 + BN_EPS)
    t1 = b1 - rm1 * s1
    w_m2f = (p["conv1"]["w_m2"] * s1[None, :]).astype(BF16)       # bn1 folded into conv1's last matmul
    b_m2f = p["conv1"]["b_m2"] * s1 + t1

    g3, b3, rm3, rv3 = p["bn3"]
    s3 = g3 / jnp.sqrt(rv3 + BN_EPS)
    t3 = b3 - rm3 * s3
    fc2_wf = (s3[:, None] * p["fc2_w"]).astype(BF16)              # bn3 folded into fc2
    fc2_bf = t3 @ p["fc2_w"] + p["fc2_b"]

    # ---- fc3 folded into fc11's drug column; protein block zero-padded 63 -> 64 ----
    w11 = p["fc11_w"]                                             # [64, 128]
    wd = (p["fc3_w"] @ w11[0:1, :]).astype(BF16)                  # [32, 128]
    b11f = p["fc11_b"] + p["fc3_b"][0] * w11[0, :]                # fc3 bias routed through w11 row 0
    w11p = jnp.zeros((64, 128), F32).at[:63, :].set(w11[1:, :]).astype(BF16)

    cxw = jnp.zeros((32, 64), F32).at[:, :63].set(p["convx_w"]).astype(BF16)
    cxb = jnp.zeros((64,), F32).at[:63].set(p["convx_b"])

    # ---- output head lane padding ----
    wo_pad = jnp.zeros((32, OUT_PAD), F32).at[:, :1].set(p["out_w"]).astype(BF16)
    bo_pad = jnp.zeros((OUT_PAD,), F32).at[:1].set(p["out_b"])

    # ---- fuse the src/dst node linears into one [32, 256] matmul ----
    w_sd = jnp.concatenate([p["conv1"]["w_src"], p["conv1"]["w_dst"]], axis=1).astype(BF16)
    b_sd = jnp.concatenate([p["conv1"]["b_src"], p["conv1"]["b_dst"]], axis=0)

    # ---- pack all small vectors into one lane-aligned slab (one DMA instead of ~12) ----
    boffs, bias_total = _bias_layout()
    bias_vals = {
        "b_sd": b_sd, "b_m1": p["conv1"]["b_m1"], "ln_g": p["conv1"]["ln_g"],
        "ln_b": p["conv1"]["ln_b"], "b_m2": b_m2f, "fc1_b": p["fc1_b"],
        "fc2_b": fc2_bf, "cx_b": cxb, "b11": b11f, "fc12_b": p["fc12_b"],
        "out_b": bo_pad,
    }
    bias_packed = jnp.zeros((1, bias_total), F32)
    for name, _ in _BIAS_SEGS:
        o, s = boffs[name]
        bias_packed = bias_packed.at[:, o:o + s].set(bias_vals[name].reshape(1, -1).astype(F32))

    # ---- graph structure glue (bf16 adjacency: exact for edge multiplicities <= 256) ----
    src, dst = edge_index[0], edge_index[1]
    adj = jnp.zeros((n, n), F32).at[dst, src].add(1.0).astype(BF16)   # [N_dst, N_src] edge counts
    batch_col = batch.astype(jnp.int32).reshape(n, 1)

    args = (
        x.astype(BF16), adj, batch_col, proteins.astype(BF16),
        w_sd, p["conv1"]["w_m1"].astype(BF16), w_m2f,
        p["fc1_w"].astype(BF16), fc2_wf,
        cxw, wd, w11p, p["fc12_w"].astype(BF16), wo_pad,
        bias_packed,
    )

    out_padded = pl.pallas_call(
        functools.partial(_fused_forward_kernel, num_graphs, boffs),
        out_shape=jax.ShapeDtypeStruct((num_graphs, OUT_PAD), F32),
        in_specs=[_vmem()] * len(args),
        out_specs=_vmem(),
        scratch_shapes=[pltpu.VMEM((num_graphs, CONV_OUT), F32)],   # pooled [G, 128]
        compiler_params=pltpu.CompilerParams(vmem_limit_bytes=48 * 1024 * 1024),
    )(*args)
    return out_padded[:, :1]                                      # [G, 1]


# ------------------------------------------------------------------ deterministic parameter init
def init_linear(key, fan_in, fan_out):
    kw, kb = jax.random.split(key)
    bound = 1.0 / float(fan_in) ** 0.5
    w = jax.random.uniform(kw, (fan_in, fan_out), F32, -bound, bound)
    b = jax.random.uniform(kb, (fan_out,), F32, -bound, bound)
    return w, b


if __name__ == "__main__":
    hidden_channels = 32
    keys = jax.random.split(jax.random.PRNGKey(0), 20)

    N, G, E, EDGE_DIM, FEAT = 32, 4, 64, 6, 32

    # ---- synthetic graph batch (G graphs of N//G nodes each, node-contiguous like PyG) ----
    x = jax.random.normal(keys[0], (N, FEAT), F32)
    proteins = jax.random.normal(keys[1], (G, 32), F32)
    edge_attr = jax.random.normal(keys[2], (E, EDGE_DIM), F32)
    batch = jnp.repeat(jnp.arange(G, dtype=jnp.int32), N // G)
    per_g = E // G
    offs = jnp.repeat(jnp.arange(G, dtype=jnp.int32) * (N // G), per_g)
    src = jax.random.randint(keys[3], (E,), 0, N // G, jnp.int32) + offs
    dst = jax.random.randint(keys[4], (E,), 0, N // G, jnp.int32) + offs
    edge_index = jnp.stack([src, dst], axis=0)

    # ---- parameters ----
    params = {}
    params["enc_w"], params["enc_b"] = init_linear(keys[5], EDGE_DIM, FEAT)  # kept for fidelity (unused)

    wsrc, bsrc = init_linear(keys[6], 32, 128)
    wdst, bdst = init_linear(keys[7], 32, 128)
    wm1, bm1 = init_linear(keys[8], 128, 256)
    wm2, bm2 = init_linear(keys[9], 256, 128)
    params["conv1"] = dict(w_src=wsrc, b_src=bsrc, w_dst=wdst, b_dst=bdst,
                           w_m1=wm1, b_m1=bm1, w_m2=wm2, b_m2=bm2,
                           ln_g=jnp.ones((256,), F32), ln_b=jnp.zeros((256,), F32))

    # BatchNorm1d defaults (gamma=1, beta=0, running_mean=0, running_var=1)
    params["bn1"] = (jnp.ones((128,), F32), jnp.zeros((128,), F32),
                     jnp.zeros((128,), F32), jnp.ones((128,), F32))
    params["bn3"] = (jnp.ones((64,), F32), jnp.zeros((64,), F32),
                     jnp.zeros((64,), F32), jnp.ones((64,), F32))

    params["fc1_w"], params["fc1_b"] = init_linear(keys[10], 128, 64)
    params["fc2_w"], params["fc2_b"] = init_linear(keys[11], 64, 32)
    params["fc3_w"], params["fc3_b"] = init_linear(keys[12], 32, 1)

    params["convx_w"], params["convx_b"] = init_linear(keys[13], 32, 63)   # Conv1d(32, 63, k=1)
    params["fc11_w"], params["fc11_b"] = init_linear(keys[14], hidden_channels * 2, 128)
    params["fc12_w"], params["fc12_b"] = init_linear(keys[15], 128, 32)
    params["out_w"], params["out_b"] = init_linear(keys[16], 32, 1)

    fwd = jax.jit(gat_gcn_forward, static_argnums=6)
    out = fwd(params, proteins, edge_index, edge_attr, x, batch, G)
    out = jax.block_until_ready(out)
    assert out.shape == (G, 1) and out.dtype == F32
    assert bool(jnp.all(jnp.isfinite(out)))
    print("KERNEL_OK")
</pallas_src>

<mosaic_0001>
module attributes {stable_mosaic.version = 11 : i64} {
  func.func private @main(%arg0: i32) attributes {dimension_semantics = [#tpu.dimension_semantics<core_parallel>], iteration_bounds = array<i64: 2>, tpu.core_type = #tpu.core_type<sc_scalar_subcore>, window_params = []} {
    return
  }
}

module attributes {stable_mosaic.version = 11 : i64} {
  func.func private @main(%arg0: i32) attributes {dimension_semantics = [#tpu.dimension_semantics<core_parallel>], iteration_bounds = array<i64: 2>, tpu.core_type = #tpu.core_type<sc_scalar_subcore>, window_params = []} {
    return
  }
}

module attributes {stable_mosaic.version = 11 : i64} {
  func.func @_fused_forward_kernel(%arg0: memref<32x32xbf16, #tpu.memory_space<vmem>>, %arg1: memref<32x32xbf16, #tpu.memory_space<vmem>>, %arg2: memref<32x1xi32, #tpu.memory_space<vmem>>, %arg3: memref<4x32xbf16, #tpu.memory_space<vmem>>, %arg4: memref<32x256xbf16, #tpu.memory_space<vmem>>, %arg5: memref<128x256xbf16, #tpu.memory_space<vmem>>, %arg6: memref<256x128xbf16, #tpu.memory_space<vmem>>, %arg7: memref<128x64xbf16, #tpu.memory_space<vmem>>, %arg8: memref<64x32xbf16, #tpu.memory_space<vmem>>, %arg9: memref<32x64xbf16, #tpu.memory_space<vmem>>, %arg10: memref<32x128xbf16, #tpu.memory_space<vmem>>, %arg11: memref<64x128xbf16, #tpu.memory_space<vmem>>, %arg12: memref<128x32xbf16, #tpu.memory_space<vmem>>, %arg13: memref<32x128xbf16, #tpu.memory_space<vmem>>, %arg14: memref<1x1920xf32, #tpu.memory_space<vmem>>, %arg15: memref<4x128xf32, #tpu.memory_space<vmem>>, %arg16: memref<4x128xf32, #tpu.memory_space<vmem>>) attributes {dimension_semantics = [], scalar_prefetch = 0 : i64, scratch_operands = 1 : i64, tpu.core_type = #tpu.core_type<tc>} {
    %c0 = arith.constant 0 : index
    %c0_0 = arith.constant 0 : index
    %0 = vector.load %arg0[%c0, %c0_0] : memref<32x32xbf16, #tpu.memory_space<vmem>>, vector<32x32xbf16>
    %c0_1 = arith.constant 0 : index
    %c0_2 = arith.constant 0 : index
    %1 = vector.load %arg4[%c0_1, %c0_2] : memref<32x256xbf16, #tpu.memory_space<vmem>>, vector<32x256xbf16>
    %cst = arith.constant dense<0.000000e+00> : vector<32x256xf32>
    %2 = tpu.matmul %0, %1, %cst {dimension_numbers = #tpu.dot_dimension_numbers<[1], [0], [0], [1], [0, 0, 1, 1], [], []>} : vector<32x32xbf16>, vector<32x256xbf16>, vector<32x256xf32> -> vector<32x256xf32>
    %c0_3 = arith.constant 0 : index
    %c0_4 = arith.constant 0 : index
    %3 = vector.load %arg14[%c0_3, %c0_4] : memref<1x1920xf32, #tpu.memory_space<vmem>>, vector<1x256xf32>
    %4 = vector.broadcast %3 : vector<1x256xf32> to vector<32x256xf32>
    %5 = arith.addf %2, %4 : vector<32x256xf32>
    %6 = vector.extract_strided_slice %5 {offsets = [0, 0], sizes = [32, 128], strides = [1, 1]} : vector<32x256xf32> to vector<32x128xf32>
    %7 = vector.extract_strided_slice %5 {offsets = [0, 128], sizes = [32, 128], strides = [1, 1]} : vector<32x256xf32> to vector<32x128xf32>
    %cst_5 = arith.constant 0.000000e+00 : f32
    %8 = vector.broadcast %cst_5 : f32 to vector<32x128xf32>
    %9 = arith.maximumf %6, %8 : vector<32x128xf32>
    %cst_6 = arith.constant 1.000000e-07 : f32
    %10 = vector.broadcast %cst_6 : f32 to vector<32x128xf32>
    %11 = arith.addf %9, %10 : vector<32x128xf32>
    %cst_7 = arith.constant dense<0xFF800000> : vector<128xf32>
    %12 = vector.multi_reduction <maximumf>, %11, %cst_7 [0] : vector<32x128xf32> to vector<128xf32>
    %13 = vector.shape_cast %12 : vector<128xf32> to vector<1x128xf32>
    %14 = vector.broadcast %13 : vector<1x128xf32> to vector<32x128xf32>
    %15 = arith.subf %11, %14 : vector<32x128xf32>
    %cst_8 = arith.constant 1.000000e+00 : f32
    %16 = vector.broadcast %cst_8 : f32 to vector<32x128xf32>
    %17 = arith.mulf %16, %15 : vector<32x128xf32>
    %18 = math.exp %17 : vector<32x128xf32>
    %19 = arith.mulf %18, %11 : vector<32x128xf32>
    %20 = tpu.concatenate %18, %19 in 1 : vector<32x128xf32>, vector<32x128xf32> -> vector<32x256xf32>
    %21 = arith.truncf %20 : vector<32x256xf32> to vector<32x256xbf16>
    %c0_9 = arith.constant 0 : index
    %c0_10 = arith.constant 0 : index
    %22 = vector.load %arg1[%c0_9, %c0_10] : memref<32x32xbf16, #tpu.memory_space<vmem>>, vector<32x32xbf16>
    %cst_11 = arith.constant dense<0.000000e+00> : vector<32x256xf32>
    %23 = tpu.matmul %22, %21, %cst_11 {dimension_numbers = #tpu.dot_dimension_numbers<[1], [0], [0], [1], [0, 0, 1, 1], [], []>} : vector<32x32xbf16>, vector<32x256xbf16>, vector<32x256xf32> -> vector<32x256xf32>
    %24 = vector.extract_strided_slice %23 {offsets = [0, 0], sizes = [32, 128], strides = [1, 1]} : vector<32x256xf32> to vector<32x128xf32>
    %25 = vector.extract_strided_slice %23 {offsets = [0, 128], sizes = [32, 128], strides = [1, 1]} : vector<32x256xf32> to vector<32x128xf32>
    %cst_12 = arith.constant 9.99999968E-21 : f32
    %26 = vector.broadcast %cst_12 : f32 to vector<32x128xf32>
    %27 = arith.maximumf %24, %26 : vector<32x128xf32>
    %28 = tpu.reciprocal %27 {approx = true} : vector<32x128xf32> -> vector<32x128xf32>
    %29 = arith.mulf %25, %28 : vector<32x128xf32>
    %30 = arith.addf %29, %7 : vector<32x128xf32>
    %31 = arith.truncf %30 : vector<32x128xf32> to vector<32x128xbf16>
    %c0_13 = arith.constant 0 : index
    %c0_14 = arith.constant 0 : index
    %32 = vector.load %arg5[%c0_13, %c0_14] : memref<128x256xbf16, #tpu.memory_space<vmem>>, vector<128x256xbf16>
    %cst_15 = arith.constant dense<0.000000e+00> : vector<32x256xf32>
    %33 = tpu.matmul %31, %32, %cst_15 {dimension_numbers = #tpu.dot_dimension_numbers<[1], [0], [0], [1], [0, 0, 1, 1], [], []>} : vector<32x128xbf16>, vector<128x256xbf16>, vector<32x256xf32> -> vector<32x256xf32>
    %c0_16 = arith.constant 0 : index
    %c256 = arith.constant 256 : index
    %34 = vector.load %arg14[%c0_16, %c256] : memref<1x1920xf32, #tpu.memory_space<vmem>>, vector<1x256xf32>
    %35 = vector.broadcast %34 : vector<1x256xf32> to vector<32x256xf32>
    %36 = arith.addf %33, %35 : vector<32x256xf32>
    %cst_17 = arith.constant dense<0.000000e+00> : vector<32xf32>
    %37 = vector.multi_reduction <add>, %36, %cst_17 [1] : vector<32x256xf32> to vector<32xf32>
    %38 = vector.shape_cast %37 : vector<32xf32> to vector<32x1xf32>
    %cst_18 = arith.constant 2.560000e+02 : f32
    %39 = vector.broadcast %cst_18 : f32 to vector<32x1xf32>
    %40 = arith.divf %38, %39 : vector<32x1xf32>
    %41 = arith.mulf %36, %36 : vector<32x256xf32>
    %cst_19 = arith.constant dense<0.000000e+00> : vector<32xf32>
    %42 = vector.multi_reduction <add>, %41, %cst_19 [1] : vector<32x256xf32> to vector<32xf32>
    %43 = vector.shape_cast %42 : vector<32xf32> to vector<32x1xf32>
    %cst_20 = arith.constant 2.560000e+02 : f32
    %44 = vector.broadcast %cst_20 : f32 to vector<32x1xf32>
    %45 = arith.divf %43, %44 : vector<32x1xf32>
    %46 = arith.mulf %40, %40 : vector<32x1xf32>
    %47 = arith.subf %45, %46 : vector<32x1xf32>
    %cst_21 = arith.constant 0.000000e+00 : f32
    %48 = vector.broadcast %cst_21 : f32 to vector<32x1xf32>
    %49 = arith.maximumf %47, %48 : vector<32x1xf32>
    %50 = vector.broadcast %40 : vector<32x1xf32> to vector<32x256xf32>
    %51 = arith.subf %36, %50 : vector<32x256xf32>
    %cst_22 = arith.constant 9.99999974E-6 : f32
    %52 = vector.broadcast %cst_22 : f32 to vector<32x1xf32>
    %53 = arith.addf %49, %52 : vector<32x1xf32>
    %54 = math.rsqrt %53 : vector<32x1xf32>
    %55 = vector.broadcast %54 : vector<32x1xf32> to vector<32x256xf32>
    %56 = arith.mulf %51, %55 : vector<32x256xf32>
    %c0_23 = arith.constant 0 : index
    %c512 = arith.constant 512 : index
    %57 = vector.load %arg14[%c0_23, %c512] : memref<1x1920xf32, #tpu.memory_space<vmem>>, vector<1x256xf32>
    %58 = vector.broadcast %57 : vector<1x256xf32> to vector<32x256xf32>
    %59 = arith.mulf %56, %58 : vector<32x256xf32>
    %c0_24 = arith.constant 0 : index
    %c768 = arith.constant 768 : index
    %60 = vector.load %arg14[%c0_24, %c768] : memref<1x1920xf32, #tpu.memory_space<vmem>>, vector<1x256xf32>
    %61 = vector.broadcast %60 : vector<1x256xf32> to vector<32x256xf32>
    %62 = arith.addf %59, %61 : vector<32x256xf32>
    %cst_25 = arith.constant 0.000000e+00 : f32
    %63 = vector.broadcast %cst_25 : f32 to vector<32x256xf32>
    %64 = arith.maximumf %62, %63 : vector<32x256xf32>
    %65 = arith.truncf %64 : vector<32x256xf32> to vector<32x256xbf16>
    %c0_26 = arith.constant 0 : index
    %c0_27 = arith.constant 0 : index
    %66 = vector.load %arg6[%c0_26, %c0_27] : memref<256x128xbf16, #tpu.memory_space<vmem>>, vector<256x128xbf16>
    %cst_28 = arith.constant dense<0.000000e+00> : vector<32x128xf32>
    %67 = tpu.matmul %65, %66, %cst_28 {dimension_numbers = #tpu.dot_dimension_numbers<[1], [0], [0], [1], [0, 0, 1, 1], [], []>} : vector<32x256xbf16>, vector<256x128xbf16>, vector<32x128xf32> -> vector<32x128xf32>
    %c0_29 = arith.constant 0 : index
    %c1024 = arith.constant 1024 : index
    %68 = vector.load %arg14[%c0_29, %c1024] : memref<1x1920xf32, #tpu.memory_space<vmem>>, vector<1x128xf32>
    %69 = vector.broadcast %68 : vector<1x128xf32> to vector<32x128xf32>
    %70 = arith.addf %67, %69 : vector<32x128xf32>
    %c0_i32 = arith.constant 0 : i32
    %c4_i32 = arith.constant 4 : i32
    %71 = arith.addi %c0_i32, %c4_i32 : i32
    %c1_i32 = arith.constant 1 : i32
    scf.for %arg17 = %c0_i32 to %71 step %c1_i32  : i32 {
      %c0_68 = arith.constant 0 : index
      %c0_69 = arith.constant 0 : index
      %122 = vector.load %arg2[%c0_68, %c0_69] : memref<32x1xi32, #tpu.memory_space<vmem>>, vector<32x1xi32>
      %123 = vector.broadcast %arg17 : i32 to vector<32x1xi32>
      %124 = arith.cmpi eq, %122, %123 : vector<32x1xi32>
      %cst_70 = arith.constant -1.000000e+30 : f32
      %125 = vector.shape_cast %124 : vector<32x1xi1> to vector<32x1xi1>
      %126 = vector.broadcast %125 : vector<32x1xi1> to vector<32x128xi1>
      %127 = vector.broadcast %cst_70 : f32 to vector<32x128xf32>
      %128 = arith.select %126, %70, %127 : vector<32x128xi1>, vector<32x128xf32>
      %cst_71 = arith.constant dense<0xFF800000> : vector<128xf32>
      %129 = vector.multi_reduction <maximumf>, %128, %cst_71 [0] : vector<32x128xf32> to vector<128xf32>
      %130 = vector.shape_cast %129 : vector<128xf32> to vector<1x128xf32>
      %131 = arith.index_cast %arg17 : i32 to index
      %c0_72 = arith.constant 0 : index
      %132 = vector.load %arg16[%131, %c0_72] : memref<4x128xf32, #tpu.memory_space<vmem>>, vector<1x128xf32>
      tpu.vector_store %arg16[%131, %c0_72], %130 {strides = array<i32>} : memref<4x128xf32, #tpu.memory_space<vmem>>, vector<1x128xf32>,
    }
    %c4_i32_30 = arith.constant 4 : i32
    %c0_31 = arith.constant 0 : index
    %c0_32 = arith.constant 0 : index
    %72 = vector.load %arg16[%c0_31, %c0_32] : memref<4x128xf32, #tpu.memory_space<vmem>>, vector<4x128xf32>
    %73 = arith.truncf %72 : vector<4x128xf32> to vector<4x128xbf16>
    %c0_33 = arith.constant 0 : index
    %c0_34 = arith.constant 0 : index
    %74 = vector.load %arg7[%c0_33, %c0_34] : memref<128x64xbf16, #tpu.memory_space<vmem>>, vector<128x64xbf16>
    %cst_35 = arith.constant dense<0.000000e+00> : vector<4x64xf32>
    %75 = tpu.matmul %73, %74, %cst_35 {dimension_numbers = #tpu.dot_dimension_numbers<[1], [0], [0], [1], [0, 0, 1, 1], [], []>} : vector<4x128xbf16>, vector<128x64xbf16>, vector<4x64xf32> -> vector<4x64xf32>
    %c0_36 = arith.constant 0 : index
    %c1152 = arith.constant 1152 : index
    %76 = vector.load %arg14[%c0_36, %c1152] : memref<1x1920xf32, #tpu.memory_space<vmem>>, vector<1x64xf32>
    %77 = vector.broadcast %76 : vector<1x64xf32> to vector<4x64xf32>
    %78 = arith.addf %75, %77 : vector<4x64xf32>
    %cst_37 = arith.constant 0.000000e+00 : f32
    %79 = vector.broadcast %cst_37 : f32 to vector<4x64xf32>
    %80 = arith.maximumf %78, %79 : vector<4x64xf32>
    %81 = arith.truncf %80 : vector<4x64xf32> to vector<4x64xbf16>
    %c0_38 = arith.constant 0 : index
    %c0_39 = arith.constant 0 : index
    %82 = vector.load %arg8[%c0_38, %c0_39] : memref<64x32xbf16, #tpu.memory_space<vmem>>, vector<64x32xbf16>
    %cst_40 = arith.constant dense<0.000000e+00> : vector<4x32xf32>
    %83 = tpu.matmul %81, %82, %cst_40 {dimension_numbers = #tpu.dot_dimension_numbers<[1], [0], [0], [1], [0, 0, 1, 1], [], []>} : vector<4x64xbf16>, vector<64x32xbf16>, vector<4x32xf32> -> vector<4x32xf32>
    %c0_41 = arith.constant 0 : index
    %c1280 = arith.constant 1280 : index
    %84 = vector.load %arg14[%c0_41, %c1280] : memref<1x1920xf32, #tpu.memory_space<vmem>>, vector<1x32xf32>
    %85 = vector.broadcast %84 : vector<1x32xf32> to vector<4x32xf32>
    %86 = arith.addf %83, %85 : vector<4x32xf32>
    %cst_42 = arith.constant 0.000000e+00 : f32
    %87 = vector.broadcast %cst_42 : f32 to vector<4x32xf32>
    %88 = arith.maximumf %86, %87 : vector<4x32xf32>
    %c0_43 = arith.constant 0 : index
    %c0_44 = arith.constant 0 : index
    %89 = vector.load %arg3[%c0_43, %c0_44] : memref<4x32xbf16, #tpu.memory_space<vmem>>, vector<4x32xbf16>
    %c0_45 = arith.constant 0 : index
    %c0_46 = arith.constant 0 : index
    %90 = vector.load %arg9[%c0_45, %c0_46] : memref<32x64xbf16, #tpu.memory_space<vmem>>, vector<32x64xbf16>
    %cst_47 = arith.constant dense<0.000000e+00> : vector<4x64xf32>
    %91 = tpu.matmul %89, %90, %cst_47 {dimension_numbers = #tpu.dot_dimension_numbers<[1], [0], [0], [1], [0, 0, 1, 1], [], []>} : vector<4x32xbf16>, vector<32x64xbf16>, vector<4x64xf32> -> vector<4x64xf32>
    %c0_48 = arith.constant 0 : index
    %c1408 = arith.constant 1408 : index
    %92 = vector.load %arg14[%c0_48, %c1408] : memref<1x1920xf32, #tpu.memory_space<vmem>>, vector<1x64xf32>
    %93 = vector.broadcast %92 : vector<1x64xf32> to vector<4x64xf32>
    %94 = arith.addf %91, %93 : vector<4x64xf32>
    %cst_49 = arith.constant 0.000000e+00 : f32
    %95 = vector.broadcast %cst_49 : f32 to vector<4x64xf32>
    %96 = arith.maximumf %94, %95 : vector<4x64xf32>
    %97 = arith.truncf %88 : vector<4x32xf32> to vector<4x32xbf16>
    %c0_50 = arith.constant 0 : index
    %c0_51 = arith.constant 0 : index
    %98 = vector.load %arg10[%c0_50, %c0_51] : memref<32x128xbf16, #tpu.memory_space<vmem>>, vector<32x128xbf16>
    %cst_52 = arith.constant dense<0.000000e+00> : vector<4x128xf32>
    %99 = tpu.matmul %97, %98, %cst_52 {dimension_numbers = #tpu.dot_dimension_numbers<[1], [0], [0], [1], [0, 0, 1, 1], [], []>} : vector<4x32xbf16>, vector<32x128xbf16>, vector<4x128xf32> -> vector<4x128xf32>
    %100 = arith.truncf %96 : vector<4x64xf32> to vector<4x64xbf16>
    %c0_53 = arith.constant 0 : index
    %c0_54 = arith.constant 0 : index
    %101 = vector.load %arg11[%c0_53, %c0_54] : memref<64x128xbf16, #tpu.memory_space<vmem>>, vector<64x128xbf16>
    %cst_55 = arith.constant dense<0.000000e+00> : vector<4x128xf32>
    %102 = tpu.matmul %100, %101, %cst_55 {dimension_numbers = #tpu.dot_dimension_numbers<[1], [0], [0], [1], [0, 0, 1, 1], [], []>} : vector<4x64xbf16>, vector<64x128xbf16>, vector<4x128xf32> -> vector<4x128xf32>
    %103 = arith.addf %99, %102 : vector<4x128xf32>
    %c0_56 = arith.constant 0 : index
    %c1536 = arith.constant 1536 : index
    %104 = vector.load %arg14[%c0_56, %c1536] : memref<1x1920xf32, #tpu.memory_space<vmem>>, vector<1x128xf32>
    %105 = vector.broadcast %104 : vector<1x128xf32> to vector<4x128xf32>
    %106 = arith.addf %103, %105 : vector<4x128xf32>
    %107 = arith.truncf %106 : vector<4x128xf32> to vector<4x128xbf16>
    %c0_57 = arith.constant 0 : index
    %c0_58 = arith.constant 0 : index
    %108 = vector.load %arg12[%c0_57, %c0_58] : memref<128x32xbf16, #tpu.memory_space<vmem>>, vector<128x32xbf16>
    %cst_59 = arith.constant dense<0.000000e+00> : vector<4x32xf32>
    %109 = tpu.matmul %107, %108, %cst_59 {dimension_numbers = #tpu.dot_dimension_numbers<[1], [0], [0], [1], [0, 0, 1, 1], [], []>} : vector<4x128xbf16>, vector<128x32xbf16>, vector<4x32xf32> -> vector<4x32xf32>
    %c0_60 = arith.constant 0 : index
    %c1664 = arith.constant 1664 : index
    %110 = vector.load %arg14[%c0_60, %c1664] : memref<1x1920xf32, #tpu.memory_space<vmem>>, vector<1x32xf32>
    %111 = vector.broadcast %110 : vector<1x32xf32> to vector<4x32xf32>
    %112 = arith.addf %109, %111 : vector<4x32xf32>
    %cst_61 = arith.constant 0.000000e+00 : f32
    %113 = vector.broadcast %cst_61 : f32 to vector<4x32xf32>
    %114 = arith.maximumf %112, %113 : vector<4x32xf32>
    %115 = arith.truncf %114 : vector<4x32xf32> to vector<4x32xbf16>
    %c0_62 = arith.constant 0 : index
    %c0_63 = arith.constant 0 : index
    %116 = vector.load %arg13[%c0_62, %c0_63] : memref<32x128xbf16, #tpu.memory_space<vmem>>, vector<32x128xbf16>
    %cst_64 = arith.constant dense<0.000000e+00> : vector<4x128xf32>
    %117 = tpu.matmul %115, %116, %cst_64 {dimension_numbers = #tpu.dot_dimension_numbers<[1], [0], [0], [1], [0, 0, 1, 1], [], []>} : vector<4x32xbf16>, vector<32x128xbf16>, vector<4x128xf32> -> vector<4x128xf32>
    %c0_65 = arith.constant 0 : index
    %c1792 = arith.constant 1792 : index
    %118 = vector.load %arg14[%c0_65, %c1792] : memref<1x1920xf32, #tpu.memory_space<vmem>>, vector<1x128xf32>
    %119 = vector.broadcast %118 : vector<1x128xf32> to vector<4x128xf32>
    %120 = arith.addf %117, %119 : vector<4x128xf32>
    %c0_66 = arith.constant 0 : index
    %c0_67 = arith.constant 0 : index
    %121 = vector.load %arg15[%c0_66, %c0_67] : memref<4x128xf32, #tpu.memory_space<vmem>>, vector<4x128xf32>
    tpu.vector_store %arg15[%c0_66, %c0_67], %120 {strides = array<i32>} : memref<4x128xf32, #tpu.memory_space<vmem>>, vector<4x128xf32>,
    return
  }
}

</mosaic_0001>

<llo_original>
// kernel: gat_gcn_forward.1
$region0: #{gat_gcn_forward.1}
  #allocation0 [shape = 'u32[]', space=smem, size = 0x4, offset = 0x4, fixed_abs, tag = 'smem constant byte address 0x4 - core index']
  #allocation1 [shape = 'u32[144,128]{1,0:T(1,128)}', space=vmem, size = 0x12000, scoped, tag = 'internal scratch']
  #allocation2 [shape = 'f32[4,128]{1,0:T(4,128)}', space=vmem, size = 0x800, scoped, tag = 'scratch operand']
  %s0 = inlined_call_operand.vmem [shape: bf16[32,32], index: 0, kind: input, shape index: {}]
  %s1 = inlined_call_operand.vmem [shape: bf16[32,32], index: 1, kind: input, shape index: {}]
  %s2 = inlined_call_operand.vmem [shape: s32[32,1], index: 2, kind: input, shape index: {}]
  %s3 = inlined_call_operand.vmem [shape: bf16[4,32], index: 3, kind: input, shape index: {}]
  %s4 = inlined_call_operand.vmem [shape: bf16[32,256], index: 4, kind: input, shape index: {}]
  %s5 = inlined_call_operand.vmem [shape: bf16[128,256], index: 5, kind: input, shape index: {}]
  %s6 = inlined_call_operand.vmem [shape: bf16[256,128], index: 6, kind: input, shape index: {}]
  %s7 = inlined_call_operand.vmem [shape: bf16[128,64], index: 7, kind: input, shape index: {}]
  %s8 = inlined_call_operand.vmem [shape: bf16[64,32], index: 8, kind: input, shape index: {}]
  %s9 = inlined_call_operand.vmem [shape: bf16[32,64], index: 9, kind: input, shape index: {}]
  %s10 = inlined_call_operand.vmem [shape: bf16[32,128], index: 10, kind: input, shape index: {}]
  %s11 = inlined_call_operand.vmem [shape: bf16[64,128], index: 11, kind: input, shape index: {}]
  %s12 = inlined_call_operand.vmem [shape: bf16[128,32], index: 12, kind: input, shape index: {}]
  %s13 = inlined_call_operand.vmem [shape: bf16[32,128], index: 13, kind: input, shape index: {}]
  %s14 = inlined_call_operand.vmem [shape: f32[1,1920], index: 14, kind: input, shape index: {}]
  %s15 = inlined_call_operand.vmem [shape: f32[4,128], index: 15, kind: output, shape index: {}]
  %s16 = sld [smem:[#allocation0]]
  $region77: #{gat_gcn_forward.1} parent=0
    _
  %s18 = ssub.s32 1, %s16
  %s19 = scalar_select 0, %s18, %s16
  // Predicated region
  $region2: #{gat_gcn_forward.1} parent=0 // pred_check
    _
  $region3: #{gat_gcn_forward.1} parent=0 // pred_check_branch
    %21 = sbr.rel (0) target = $region5
  $region4: #{gat_gcn_forward.1} parent=0 // pred_region
    _
  $region5: #{gat_gcn_forward.1} parent=0 // pred_fallthru
    _
  // Predicated region
  $region6: #{gat_gcn_forward.1} parent=0 // pred_check
    _
  $region7: #{gat_gcn_forward.1} parent=0 // pred_check_branch
    %23 = sbr.rel (0) target = $region9
  $region8: #{gat_gcn_forward.1} parent=0 // pred_region
    _
  $region9: #{gat_gcn_forward.1} parent=0 // pred_fallthru
    _
  // Predicated region
  $region10: #{gat_gcn_forward.1} parent=0 // pred_check
    _
  $region11: #{gat_gcn_forward.1} parent=0 // pred_check_branch
    %25 = sbr.rel (0) target = $region13
  $region12: #{gat_gcn_forward.1} parent=0 // pred_region
    _
  $region13: #{gat_gcn_forward.1} parent=0 // pred_fallthru
    _
  // Predicated region
  $region14: #{gat_gcn_forward.1} parent=0 // pred_check
    _
  $region15: #{gat_gcn_forward.1} parent=0 // pred_check_branch
    %27 = sbr.rel (0) target = $region17
  $region16: #{gat_gcn_forward.1} parent=0 // pred_region
    _
  $region17: #{gat_gcn_forward.1} parent=0 // pred_fallthru
    _
  // Predicated region
  $region18: #{gat_gcn_forward.1} parent=0 // pred_check
    _
  $region19: #{gat_gcn_forward.1} parent=0 // pred_check_branch
    %29 = sbr.rel (0) target = $region21
  $region20: #{gat_gcn_forward.1} parent=0 // pred_region
    _
  $region21: #{gat_gcn_forward.1} parent=0 // pred_fallthru
    _
  // Predicated region
  $region22: #{gat_gcn_forward.1} parent=0 // pred_check
    _
  $region23: #{gat_gcn_forward.1} parent=0 // pred_check_branch
    %31 = sbr.rel (0) target = $region25
  $region24: #{gat_gcn_forward.1} parent=0 // pred_region
    _
  $region25: #{gat_gcn_forward.1} parent=0 // pred_fallthru
    _
  // Predicated region
  $region26: #{gat_gcn_forward.1} parent=0 // pred_check
    _
  $region27: #{gat_gcn_forward.1} parent=0 // pred_check_branch
    %33 = sbr.rel (0) target = $region29
  $region28: #{gat_gcn_forward.1} parent=0 // pred_region
    _
  $region29: #{gat_gcn_forward.1} parent=0 // pred_fallthru
    _
  // Predicated region
  $region30: #{gat_gcn_forward.1} parent=0 // pred_check
    _
  $region31: #{gat_gcn_forward.1} parent=0 // pred_check_branch
    %35 = sbr.rel (0) target = $region33
  $region32: #{gat_gcn_forward.1} parent=0 // pred_region
    _
  $region33: #{gat_gcn_forward.1} parent=0 // pred_fallthru
    _
  // Predicated region
  $region34: #{gat_gcn_forward.1} parent=0 // pred_check
    _
  $region35: #{gat_gcn_forward.1} parent=0 // pred_check_branch
    %37 = sbr.rel (0) target = $region37
  $region36: #{gat_gcn_forward.1} parent=0 // pred_region
    _
  $region37: #{gat_gcn_forward.1} parent=0 // pred_fallthru
    _
  // Predicated region
  $region38: #{gat_gcn_forward.1} parent=0 // pred_check
    _
  $region39: #{gat_gcn_forward.1} parent=0 // pred_check_branch
    %39 = sbr.rel (0) target = $region41
  $region40: #{gat_gcn_forward.1} parent=0 // pred_region
    _
  $region41: #{gat_gcn_forward.1} parent=0 // pred_fallthru
    _
  // Predicated region
  $region42: #{gat_gcn_forward.1} parent=0 // pred_check
    _
  $region43: #{gat_gcn_forward.1} parent=0 // pred_check_branch
    %41 = sbr.rel (0) target = $region45
  $region44: #{gat_gcn_forward.1} parent=0 // pred_region
    _
  $region45: #{gat_gcn_forward.1} parent=0 // pred_fallthru
    _
  // Predicated region
  $region46: #{gat_gcn_forward.1} parent=0 // pred_check
    _
  $region47: #{gat_gcn_forward.1} parent=0 // pred_check_branch
    %43 = sbr.rel (0) target = $region49
  $region48: #{gat_gcn_forward.1} parent=0 // pred_region
    _
  $region49: #{gat_gcn_forward.1} parent=0 // pred_fallthru
    _
  // Predicated region
  $region50: #{gat_gcn_forward.1} parent=0 // pred_check
    _
  $region51: #{gat_gcn_forward.1} parent=0 // pred_check_branch
    %45 = sbr.rel (0) target = $region53
  $region52: #{gat_gcn_forward.1} parent=0 // pred_region
    _
  $region53: #{gat_gcn_forward.1} parent=0 // pred_fallthru
    _
  // Predicated region
  $region54: #{gat_gcn_forward.1} parent=0 // pred_check
    _
  $region55: #{gat_gcn_forward.1} parent=0 // pred_check_branch
    %47 = sbr.rel (0) target = $region57
  $region56: #{gat_gcn_forward.1} parent=0 // pred_region
    _
  $region57: #{gat_gcn_forward.1} parent=0 // pred_fallthru
    _
  // Predicated region
  $region58: #{gat_gcn_forward.1} parent=0 // pred_check
    _
  $region59: #{gat_gcn_forward.1} parent=0 // pred_check_branch
    %49 = sbr.rel (0) target = $region61
  $region60: #{gat_gcn_forward.1} parent=0 // pred_region
    _
  $region61: #{gat_gcn_forward.1} parent=0 // pred_fallthru
    _
  %v51 = vld [vmem:[%s0] sm:$0xf]
  %v52 = vld [vmem:[%s0 + $0x4] sm:$0xf]
  %v53 = vld [vmem:[%s0 + $0x8] sm:$0xf]
  %v54 = vld [vmem:[%s0 + $0xc] sm:$0xf]
  %v55 = vld [vmem:[%s4] sm:$0xff]
  %v56 = vld [vmem:[%s4 + $0x8] sm:$0xff]
  %v57 = vld [vmem:[%s4 + $0x10] sm:$0xff]
  %v58 = vld [vmem:[%s4 + $0x18] sm:$0xff]
  %v59 = vld [vmem:[%s14] sm:$0x3]
  %v61 = vlaneseq
  %v62 = vshrl.u32 %v61, 7
  %v63 = vsub.s32 0, %v62
  %v64 = vrot.slane %v59, %v63
  %v65 = vlaneseq
  %v66 = vshrl.u32 %v65, 7
  %v67 = vsub.s32 1, %v66
  %v68 = vrot.slane %v59, %v67
  %v75 = vunpack.c.l.b16 %v51
  %v76 = vunpack.c.l.b16 %v52
  %v77 = vunpack.c.l.b16 %v53
  %v78 = vunpack.c.l.b16 %v54
  %v79 = vpack.c.b16 %v76, %v75
  %v80 = vpack.c.b16 %v78, %v77
  %v85 = vunpack.c.l.b16 %v55
  %v86 = vunpack.c.h.b16 %v55
  %v87 = vunpack.c.l.b16 %v56
  %v88 = vunpack.c.h.b16 %v56
  %v89 = vunpack.c.l.b16 %v57
  %v90 = vunpack.c.h.b16 %v57
  %v91 = vunpack.c.l.b16 %v58
  %v92 = vunpack.c.h.b16 %v58
  %v93 = vpack.c.b16 %v87, %v85
  %v94 = vpack.c.b16 %v88, %v86
  %v95 = vpack.c.b16 %v91, %v89
  %v96 = vpack.c.b16 %v92, %v90
  %vm101 = vcmask 261120
  %v103 = vsel %vm101, %v79, 0
  %v106 = vsel %vm101, %v80, 0
  %108 = vmatprep.subr.bf16.mxu0 %v94
  %109 = vmatpush1.bf16.msra.mxu0 %v93
  %110 = vmatprep.subr.bf16.mxu0 %v96
  %111 = vmatpush1.bf16.msra.mxu0 %v95
  %112 = vmatprep.subr.bf16.mxu0 0
  %113 = vmatpush1.bf16.msra.mxu0 0
  %114 = vmatprep.subr.bf16.mxu0 0
  %115 = vmatpush1.bf16.msra.mxu0 0
  %116 = vmatprep.subr.bf16.mxu0 0
  %117 = vmatpush1.bf16.msra.mxu0 0
  %118 = vmatprep.subr.bf16.mxu0 0
  %119 = vmatpush1.bf16.msra.mxu0 0
  %120 = vmatprep.subr.bf16.mxu0 0
  %121 = vmatpush1.bf16.msra.mxu0 0
  %122 = vmatprep.subr.bf16.mxu0 0
  %123 = vmatpush1.bf16.msra.mxu0 0
  %124 = vmatprep.subr.bf16.mxu0 0
  %125 = vmatpush1.bf16.msra.mxu0 0
  %126 = vmatprep.subr.bf16.mxu0 0
  %127 = vmatpush1.bf16.msra.mxu0 0
  %128 = vmatprep.subr.bf16.mxu0 0
  %129 = vmatpush1.bf16.msra.mxu0 0
  %130 = vmatprep.subr.bf16.mxu0 0
  %131 = vmatpush1.bf16.msra.mxu0 0
  %132 = vmatprep.subr.bf16.mxu0 0
  %133 = vmatpush1.bf16.msra.mxu0 0
  %134 = vmatprep.subr.bf16.mxu0 0
  %135 = vmatpush1.bf16.msra.mxu0 0
  %136 = vmatprep.subr.bf16.mxu0 0
  %137 = vmatpush1.bf16.msra.mxu0 0
  %138 = vmatprep.subr.bf16.mxu0 0
  %139 = vmatpush1.bf16.msra.mxu0 0
  %140 = vmatprep.mubr.bf16.mxu0 0
  %141 = vmatmul.mubr.bf16.gmra.mrb[0].mxu0 %v103
  %v142 = vpop.f32.mrb[0].mxu0
  %v143 = vadd.f32 %v64, %v142
  %v144 = vpop.f32.mrb[0].mxu0
  %v145 = vadd.f32 %v68, %v144
  %v146 = vpop.f32.mrb[0].mxu0
  %v147 = vadd.f32 %v64, %v146
  %v148 = vpop.f32.mrb[0].mxu0
  %v149 = vadd.f32 %v68, %v148
  %150 = vmatprep.mubr.bf16.mxu0 0
  %151 = vmatmul.mubr.bf16.gmra.mrb[0].mxu0 %v106
  %v152 = vpop.f32.mrb[0].mxu0
  %v153 = vadd.f32 %v64, %v152
  %v154 = vpop.f32.mrb[0].mxu0
  %v155 = vadd.f32 %v68, %v154
  %v156 = vpop.f32.mrb[0].mxu0
  %v157 = vadd.f32 %v64, %v156
  %v158 = vpop.f32.mrb[0].mxu0
  %v159 = vadd.f32 %v68, %v158
  %160 = vdwg.mxu0
  %v161 = vmax.f32 %v143, 0.0
  %v162 = vmax.f32 %v147, 0.0
  %v163 = vmax.f32 %v153, 0.0
  %v164 = vmax.f32 %v157, 0.0
  %v165 = vadd.f32 %v161, 1e-07
  %v166 = vadd.f32 %v162, 1e-07
  %v167 = vadd.f32 %v163, 1e-07
  %v168 = vadd.f32 %v164, 1e-07
  %v169 = vmax.f32 %v165, %v166
  %v170 = vmax.f32 %v167, %v168
  %v171 = vmax.f32 %v169, %v170
  %v172 = vrot.slane %v171, 4
  %v173 = vmax.f32 %v171, %v172
  %v174 = vrot.slane %v173, 2
  %v175 = vmax.f32 %v173, %v174
  %v176 = vrot.slane %v175, 1
  %v177 = vmax.f32 %v175, %v176
  %v178 = vsub.f32 %v165, %v177
  %v179 = vsub.f32 %v166, %v177
  %v180 = vsub.f32 %v167, %v177
  %v181 = vsub.f32 %v168, %v177
  %v182 = vmul.f32 %v178, 1.442695
  %v183 = vpow.pop %v182
  %v184 = vmul.f32 %v179, 1.442695
  %v185 = vpow.pop %v184
  %v186 = vmul.f32 %v180, 1.442695
  %v187 = vpow.pop %v186
  %v188 = vmul.f32 %v181, 1.442695
  %v189 = vpow.pop %v188
  %v190 = vmul.f32 %v183, %v165
  %v191 = vmul.f32 %v185, %v166
  %v192 = vmul.f32 %v187, %v167
  %v193 = vmul.f32 %v189, %v168
  %v194 = vpack.c.bf16 %v185, %v183
  %v195 = vpack.c.bf16 %v191, %v190
  %v196 = vpack.c.bf16 %v189, %v187
  %v197 = vpack.c.bf16 %v193, %v192
  %v198 = vld [vmem:[%s1] sm:$0xf]
  %v199 = vld [vmem:[%s1 + $0x4] sm:$0xf]
  %v200 = vld [vmem:[%s1 + $0x8] sm:$0xf]
  %v201 = vld [vmem:[%s1 + $0xc] sm:$0xf]
  %v206 = vunpack.c.l.b16 %v198
  %v207 = vunpack.c.l.b16 %v199
  %v208 = vunpack.c.l.b16 %v200
  %v209 = vunpack.c.l.b16 %v201
  %v210 = vpack.c.b16 %v207, %v206
  %v211 = vpack.c.b16 %v209, %v208
  %v213 = vsel %vm101, %v210, 0
  %v216 = vsel %vm101, %v211, 0
  %218 = vmatprep.subr.bf16.mxu0 %v195
  %219 = vmatpush1.bf16.msra.mxu0 %v194
  %220 = vmatprep.subr.bf16.mxu0 %v197
  %221 = vmatpush1.bf16.msra.mxu0 %v196
  %222 = vmatprep.subr.bf16.mxu0 0
  %223 = vmatpush1.bf16.msra.mxu0 0
  %224 = vmatprep.subr.bf16.mxu0 0
  %225 = vmatpush1.bf16.msra.mxu0 0
  %226 = vmatprep.subr.bf16.mxu0 0
  %227 = vmatpush1.bf16.msra.mxu0 0
  %228 = vmatprep.subr.bf16.mxu0 0
  %229 = vmatpush1.bf16.msra.mxu0 0
  %230 = vmatprep.subr.bf16.mxu0 0
  %231 = vmatpush1.bf16.msra.mxu0 0
  %232 = vmatprep.subr.bf16.mxu0 0
  %233 = vmatpush1.bf16.msra.mxu0 0
  %234 = vmatprep.subr.bf16.mxu0 0
  %235 = vmatpush1.bf16.msra.mxu0 0
  %236 = vmatprep.subr.bf16.mxu0 0
  %237 = vmatpush1.bf16.msra.mxu0 0
  %238 = vmatprep.subr.bf16.mxu0 0
  %239 = vmatpush1.bf16.msra.mxu0 0
  %240 = vmatprep.subr.bf16.mxu0 0
  %241 = vmatpush1.bf16.msra.mxu0 0
  %242 = vmatprep.subr.bf16.mxu0 0
  %243 = vmatpush1.bf16.msra.mxu0 0
  %244 = vmatprep.subr.bf16.mxu0 0
  %245 = vmatpush1.bf16.msra.mxu0 0
  %246 = vmatprep.subr.bf16.mxu0 0
  %247 = vmatpush1.bf16.msra.mxu0 0
  %248 = vmatprep.subr.bf16.mxu0 0
  %249 = vmatpush1.bf16.msra.mxu0 0
  %250 = vmatprep.mubr.bf16.mxu0 0
  %251 = vmatmul.mubr.bf16.gmra.mrb[0].mxu0 %v213
  %v252 = vpop.f32.mrb[0].mxu0
  %v253 = vadd.f32 0.0, %v252
  %v254 = vpop.f32.mrb[0].mxu0
  %v255 = vadd.f32 0.0, %v254
  %v256 = vpop.f32.mrb[0].mxu0
  %v257 = vadd.f32 0.0, %v256
  %v258 = vpop.f32.mrb[0].mxu0
  %v259 = vadd.f32 0.0, %v258
  %260 = vmatprep.mubr.bf16.mxu0 0
  %261 = vmatmul.mubr.bf16.gmra.mrb[0].mxu0 %v216
  %v262 = vpop.f32.mrb[0].mxu0
  %v263 = vadd.f32 0.0, %v262
  %v264 = vpop.f32.mrb[0].mxu0
  %v265 = vadd.f32 0.0, %v264
  %v266 = vpop.f32.mrb[0].mxu0
  %v267 = vadd.f32 0.0, %v266
  %v268 = vpop.f32.mrb[0].mxu0
  %v269 = vadd.f32 0.0, %v268
  %270 = vdwg.mxu0
  %v271 = vmax.f32 %v253, 1e-20
  %v272 = vmax.f32 %v257, 1e-20
  %v273 = vmax.f32 %v263, 1e-20
  %v274 = vmax.f32 %v267, 1e-20
  %v275 = vrcp.pop %v271
  %v276 = vrcp.pop %v272
  %v277 = vrcp.pop %v273
  %v278 = vrcp.pop %v274
  %v279 = vmul.f32 %v255, %v275
  %v280 = vmul.f32 %v259, %v276
  %v281 = vmul.f32 %v265, %v277
  %v282 = vmul.f32 %v269, %v278
  %v283 = vadd.f32 %v279, %v145
  %v284 = vadd.f32 %v280, %v149
  %v285 = vadd.f32 %v281, %v155
  %v286 = vadd.f32 %v282, %v159
  %v287 = vpack.c.bf16 %v284, %v283
  %v288 = vpack.c.bf16 %v286, %v285
  %v289 = vld [vmem:[%s5] sm:$0xff]
  %v290 = vld [vmem:[%s5 + $0x8] sm:$0xff]
  %v291 = vld [vmem:[%s5 + $0x10] sm:$0xff]
  %v292 = vld [vmem:[%s5 + $0x18] sm:$0xff]
  %v293 = vld [vmem:[%s5 + $0x20] sm:$0xff]
  %v294 = vld [vmem:[%s5 + $0x28] sm:$0xff]
  %v295 = vld [vmem:[%s5 + $0x30] sm:$0xff]
  %v296 = vld [vmem:[%s5 + $0x38] sm:$0xff]
  %v297 = vld [vmem:[%s5 + $0x40] sm:$0xff]
  %v298 = vld [vmem:[%s5 + $0x48] sm:$0xff]
  %v299 = vld [vmem:[%s5 + $0x50] sm:$0xff]
  %v300 = vld [vmem:[%s5 + $0x58] sm:$0xff]
  %v301 = vld [vmem:[%s5 + $0x60] sm:$0xff]
  %v302 = vld [vmem:[%s5 + $0x68] sm:$0xff]
  %v303 = vld [vmem:[%s5 + $0x70] sm:$0xff]
  %v304 = vld [vmem:[%s5 + $0x78] sm:$0xff]
  %v305 = vld [vmem:[%s14 + $0x2] sm:$0x3]
  %v307 = vlaneseq
  %v308 = vshrl.u32 %v307, 7
  %v309 = vsub.s32 0, %v308
  %v310 = vrot.slane %v305, %v309
  %v311 = vlaneseq
  %v312 = vshrl.u32 %v311, 7
  %v313 = vsub.s32 1, %v312
  %v314 = vrot.slane %v305, %v313
  %v333 = vunpack.c.l.b16 %v289
  %v334 = vunpack.c.h.b16 %v289
  %v335 = vunpack.c.l.b16 %v290
  %v336 = vunpack.c.h.b16 %v290
  %v337 = vunpack.c.l.b16 %v291
  %v338 = vunpack.c.h.b16 %v291
  %v339 = vunpack.c.l.b16 %v292
  %v340 = vunpack.c.h.b16 %v292
  %v341 = vunpack.c.l.b16 %v293
  %v342 = vunpack.c.h.b16 %v293
  %v343 = vunpack.c.l.b16 %v294
  %v344 = vunpack.c.h.b16 %v294
  %v345 = vunpack.c.l.b16 %v295
  %v346 = vunpack.c.h.b16 %v295
  %v347 = vunpack.c.l.b16 %v296
  %v348 = vunpack.c.h.b16 %v296
  %v349 = vunpack.c.l.b16 %v297
  %v350 = vunpack.c.h.b16 %v297
  %v351 = vunpack.c.l.b16 %v298
  %v352 = vunpack.c.h.b16 %v298
  %v353 = vunpack.c.l.b16 %v299
  %v354 = vunpack.c.h.b16 %v299
  %v355 = vunpack.c.l.b16 %v300
  %v356 = vunpack.c.h.b16 %v300
  %v357 = vunpack.c.l.b16 %v301
  %v358 = vunpack.c.h.b16 %v301
  %v359 = vunpack.c.l.b16 %v302
  %v360 = vunpack.c.h.b16 %v302
  %v361 = vunpack.c.l.b16 %v303
  %v362 = vunpack.c.h.b16 %v303
  %v363 = vunpack.c.l.b16 %v304
  %v364 = vunpack.c.h.b16 %v304
  %v365 = vpack.c.b16 %v335, %v333
  %v366 = vpack.c.b16 %v336, %v334
  %v367 = vpack.c.b16 %v339, %v337
  %v368 = vpack.c.b16 %v340, %v338
  %v369 = vpack.c.b16 %v343, %v341
  %v370 = vpack.c.b16 %v344, %v342
  %v371 = vpack.c.b16 %v347, %v345
  %v372 = vpack.c.b16 %v348, %v346
  %v373 = vpack.c.b16 %v351, %v349
  %v374 = vpack.c.b16 %v352, %v350
  %v375 = vpack.c.b16 %v355, %v353
  %v376 = vpack.c.b16 %v356, %v354
  %v377 = vpack.c.b16 %v359, %v357
  %v378 = vpack.c.b16 %v360, %v358
  %v379 = vpack.c.b16 %v363, %v361
  %v380 = vpack.c.b16 %v364, %v362
  %397 = vmatprep.subr.bf16.mxu0 %v366
  %398 = vmatpush1.bf16.msra.mxu0 %v365
  %399 = vmatprep.subr.bf16.mxu0 %v368
  %400 = vmatpush1.bf16.msra.mxu0 %v367
  %401 = vmatprep.subr.bf16.mxu0 %v370
  %402 = vmatpush1.bf16.msra.mxu0 %v369
  %403 = vmatprep.subr.bf16.mxu0 %v372
  %404 = vmatpush1.bf16.msra.mxu0 %v371
  %405 = vmatprep.subr.bf16.mxu0 %v374
  %406 = vmatpush1.bf16.msra.mxu0 %v373
  %407 = vmatprep.subr.bf16.mxu0 %v376
  %408 = vmatpush1.bf16.msra.mxu0 %v375
  %409 = vmatprep.subr.bf16.mxu0 %v378
  %410 = vmatpush1.bf16.msra.mxu0 %v377
  %411 = vmatprep.subr.bf16.mxu0 %v380
  %412 = vmatpush1.bf16.msra.mxu0 %v379
  %413 = vmatprep.subr.bf16.mxu0 0
  %414 = vmatpush1.bf16.msra.mxu0 0
  %415 = vmatprep.subr.bf16.mxu0 0
  %416 = vmatpush1.bf16.msra.mxu0 0
  %417 = vmatprep.subr.bf16.mxu0 0
  %418 = vmatpush1.bf16.msra.mxu0 0
  %419 = vmatprep.subr.bf16.mxu0 0
  %420 = vmatpush1.bf16.msra.mxu0 0
  %421 = vmatprep.subr.bf16.mxu0 0
  %422 = vmatpush1.bf16.msra.mxu0 0
  %423 = vmatprep.subr.bf16.mxu0 0
  %424 = vmatpush1.bf16.msra.mxu0 0
  %425 = vmatprep.subr.bf16.mxu0 0
  %426 = vmatpush1.bf16.msra.mxu0 0
  %427 = vmatprep.subr.bf16.mxu0 0
  %428 = vmatpush1.bf16.msra.mxu0 0
  %429 = vmatprep.mubr.bf16.mxu0 0
  %430 = vmatmul.mubr.bf16.gmra.mrb[0].mxu0 %v287
  %v431 = vpop.f32.mrb[0].mxu0
  %v432 = vadd.f32 %v310, %v431
  %v433 = vpop.f32.mrb[0].mxu0
  %v434 = vadd.f32 %v314, %v433
  %v435 = vpop.f32.mrb[0].mxu0
  %v436 = vadd.f32 %v310, %v435
  %v437 = vpop.f32.mrb[0].mxu0
  %v438 = vadd.f32 %v314, %v437
  %439 = vmatprep.mubr.bf16.mxu0 0
  %440 = vmatmul.mubr.bf16.gmra.mrb[0].mxu0 %v288
  %v441 = vpop.f32.mrb[0].mxu0
  %v442 = vadd.f32 %v310, %v441
  %v443 = vpop.f32.mrb[0].mxu0
  %v444 = vadd.f32 %v314, %v443
  %v445 = vpop.f32.mrb[0].mxu0
  %v446 = vadd.f32 %v310, %v445
  %v447 = vpop.f32.mrb[0].mxu0
  %v448 = vadd.f32 %v314, %v447
  %449 = vdwg.mxu0
  %v450 = vadd.f32 %v432, %v434
  %451 = vadd.xlane.f32.xlu0 %v450
  %v452 = vpop.xlane.xlu0 %451
  %v453 = vadd.f32 %v436, %v438
  %454 = vadd.xlane.f32.xlu0 %v453
  %v455 = vpop.xlane.xlu0 %454
  %v456 = vadd.f32 %v442, %v444
  %457 = vadd.xlane.f32.xlu0 %v456
  %v458 = vpop.xlane.xlu0 %457
  %v459 = vadd.f32 %v446, %v448
  %460 = vadd.xlane.f32.xlu0 %v459
  %v461 = vpop.xlane.xlu0 %460
  %v462 = vrcp.pop 256.0
  %v463 = vmul.f32 %v452, %v462
  %v464 = vmul.f32 %v455, %v462
  %v465 = vmul.f32 %v458, %v462
  %v466 = vmul.f32 %v461, %v462
  %v467 = vmul.f32 %v432, %v432
  %v468 = vmul.f32 %v434, %v434
  %v469 = vmul.f32 %v436, %v436
  %v470 = vmul.f32 %v438, %v438
  %v471 = vmul.f32 %v442, %v442
  %v472 = vmul.f32 %v444, %v444
  %v473 = vmul.f32 %v446, %v446
  %v474 = vmul.f32 %v448, %v448
  %v475 = vadd.f32 %v467, %v468
  %476 = vadd.xlane.f32.xlu0 %v475
  %v477 = vpop.xlane.xlu0 %476
  %v478 = vadd.f32 %v469, %v470
  %479 = vadd.xlane.f32.xlu0 %v478
  %v480 = vpop.xlane.xlu0 %479
  %v481 = vadd.f32 %v471, %v472
  %482 = vadd.xlane.f32.xlu0 %v481
  %v483 = vpop.xlane.xlu0 %482
  %v484 = vadd.f32 %v473, %v474
  %485 = vadd.xlane.f32.xlu0 %v484
  %v486 = vpop.xlane.xlu0 %485
  %v487 = vmul.f32 %v477, %v462
  %v488 = vmul.f32 %v480, %v462
  %v489 = vmul.f32 %v483, %v462
  %v490 = vmul.f32 %v486, %v462
  %v491 = vmul.f32 %v463, %v463
  %v492 = vmul.f32 %v464, %v464
  %v493 = vmul.f32 %v465, %v465
  %v494 = vmul.f32 %v466, %v466
  %v495 = vsub.f32 %v487, %v491
  %v496 = vsub.f32 %v488, %v492
  %v497 = vsub.f32 %v489, %v493
  %v498 = vsub.f32 %v490, %v494
  %v499 = vmax.f32 %v495, 0.0
  %v500 = vmax.f32 %v496, 0.0
  %v501 = vmax.f32 %v497, 0.0
  %v502 = vmax.f32 %v498, 0.0
  %v503 = vsub.f32 %v432, %v463
  %v504 = vsub.f32 %v434, %v463
  %v505 = vsub.f32 %v436, %v464
  %v506 = vsub.f32 %v438, %v464
  %v507 = vsub.f32 %v442, %v465
  %v508 = vsub.f32 %v444, %v465
  %v509 = vsub.f32 %v446, %v466
  %v510 = vsub.f32 %v448, %v466
  %v511 = vadd.f32 %v499, 1e-05
  %v512 = vadd.f32 %v500, 1e-05
  %v513 = vadd.f32 %v501, 1e-05
  %v514 = vadd.f32 %v502, 1e-05
  %v515 = vrsqrt.pop %v511
  %v516 = vrsqrt.pop %v512
  %v517 = vrsqrt.pop %v513
  %v518 = vrsqrt.pop %v514
  %v519 = vmul.f32 %v503, %v515
  %v520 = vmul.f32 %v504, %v515
  %v521 = vmul.f32 %v505, %v516
  %v522 = vmul.f32 %v506, %v516
  %v523 = vmul.f32 %v507, %v517
  %v524 = vmul.f32 %v508, %v517
  %v525 = vmul.f32 %v509, %v518
  %v526 = vmul.f32 %v510, %v518
  %v527 = vld [vmem:[%s14 + $0x4] sm:$0x3]
  %v529 = vlaneseq
  %v530 = vshrl.u32 %v529, 7
  %v531 = vsub.s32 0, %v530
  %v532 = vrot.slane %v527, %v531
  %v533 = vlaneseq
  %v534 = vshrl.u32 %v533, 7
  %v535 = vsub.s32 1, %v534
  %v536 = vrot.slane %v527, %v535
  %v539 = vmul.f32 %v519, %v532
  %v540 = vmul.f32 %v520, %v536
  %v541 = vmul.f32 %v521, %v532
  %v542 = vmul.f32 %v522, %v536
  %v543 = vmul.f32 %v523, %v532
  %v544 = vmul.f32 %v524, %v536
  %v545 = vmul.f32 %v525, %v532
  %v546 = vmul.f32 %v526, %v536
  %v547 = vld [vmem:[%s14 + $0x6] sm:$0x3]
  %v549 = vlaneseq
  %v550 = vshrl.u32 %v549, 7
  %v551 = vsub.s32 0, %v550
  %v552 = vrot.slane %v547, %v551
  %v553 = vlaneseq
  %v554 = vshrl.u32 %v553, 7
  %v555 = vsub.s32 1, %v554
  %v556 = vrot.slane %v547, %v555
  %v559 = vadd.f32 %v539, %v552
  %v560 = vadd.f32 %v540, %v556
  %v561 = vadd.f32 %v541, %v552
  %v562 = vadd.f32 %v542, %v556
  %v563 = vadd.f32 %v543, %v552
  %v564 = vadd.f32 %v544, %v556
  %v565 = vadd.f32 %v545, %v552
  %v566 = vadd.f32 %v546, %v556
  %v567 = vmax.f32 %v559, 0.0
  %v568 = vmax.f32 %v560, 0.0
  %v569 = vmax.f32 %v561, 0.0
  %v570 = vmax.f32 %v562, 0.0
  %v571 = vmax.f32 %v563, 0.0
  %v572 = vmax.f32 %v564, 0.0
  %v573 = vmax.f32 %v565, 0.0
  %v574 = vmax.f32 %v566, 0.0
  %v575 = vpack.c.bf16 %v569, %v567
  %v576 = vpack.c.bf16 %v570, %v568
  %v577 = vpack.c.bf16 %v573, %v571
  %v578 = vpack.c.bf16 %v574, %v572
  %v579 = vld [vmem:[%s6] sm:$0xf]
  %v580 = vld [vmem:[%s6 + $0x4] sm:$0xf]
  %v581 = vld [vmem:[%s6 + $0x8] sm:$0xf]
  %v582 = vld [vmem:[%s6 + $0xc] sm:$0xf]
  %v583 = vld [vmem:[%s6 + $0x10] sm:$0xf]
  %v584 = vld [vmem:[%s6 + $0x14] sm:$0xf]
  %v585 = vld [vmem:[%s6 + $0x18] sm:$0xf]
  %v586 = vld [vmem:[%s6 + $0x1c] sm:$0xf]
  %v587 = vld [vmem:[%s6 + $0x20] sm:$0xf]
  %v588 = vld [vmem:[%s6 + $0x24] sm:$0xf]
  %v589 = vld [vmem:[%s6 + $0x28] sm:$0xf]
  %v590 = vld [vmem:[%s6 + $0x2c] sm:$0xf]
  %v591 = vld [vmem:[%s6 + $0x30] sm:$0xf]
  %v592 = vld [vmem:[%s6 + $0x34] sm:$0xf]
  %v593 = vld [vmem:[%s6 + $0x38] sm:$0xf]
  %v594 = vld [vmem:[%s6 + $0x3c] sm:$0xf]
  %v595 = vld [vmem:[%s6 + $0x40] sm:$0xf]
  %v596 = vld [vmem:[%s6 + $0x44] sm:$0xf]
  %v597 = vld [vmem:[%s6 + $0x48] sm:$0xf]
  %v598 = vld [vmem:[%s6 + $0x4c] sm:$0xf]
  %v599 = vld [vmem:[%s6 + $0x50] sm:$0xf]
  %v600 = vld [vmem:[%s6 + $0x54] sm:$0xf]
  %v601 = vld [vmem:[%s6 + $0x58] sm:$0xf]
  %v602 = vld [vmem:[%s6 + $0x5c] sm:$0xf]
  %v603 = vld [vmem:[%s6 + $0x60] sm:$0xf]
  %v604 = vld [vmem:[%s6 + $0x64] sm:$0xf]
  %v605 = vld [vmem:[%s6 + $0x68] sm:$0xf]
  %v606 = vld [vmem:[%s6 + $0x6c] sm:$0xf]
  %v607 = vld [vmem:[%s6 + $0x70] sm:$0xf]
  %v608 = vld [vmem:[%s6 + $0x74] sm:$0xf]
  %v609 = vld [vmem:[%s6 + $0x78] sm:$0xf]
  %v610 = vld [vmem:[%s6 + $0x7c] sm:$0xf]
  %v611 = vld [vmem:[%s14 + $0x8] sm:$0x1]
  %v613 = vlaneseq
  %v614 = vshrl.u32 %v613, 7
  %v615 = vsub.s32 0, %v614
  %v616 = vrot.slane %v611, %v615
  %v650 = vunpack.c.l.b16 %v579
  %v651 = vunpack.c.l.b16 %v580
  %v652 = vunpack.c.l.b16 %v581
  %v653 = vunpack.c.l.b16 %v582
  %v654 = vunpack.c.l.b16 %v583
  %v655 = vunpack.c.l.b16 %v584
  %v656 = vunpack.c.l.b16 %v585
  %v657 = vunpack.c.l.b16 %v586
  %v658 = vunpack.c.l.b16 %v587
  %v659 = vunpack.c.l.b16 %v588
  %v660 = vunpack.c.l.b16 %v589
  %v661 = vunpack.c.l.b16 %v590
  %v662 = vunpack.c.l.b16 %v591
  %v663 = vunpack.c.l.b16 %v592
  %v664 = vunpack.c.l.b16 %v593
  %v665 = vunpack.c.l.b16 %v594
  %v666 = vunpack.c.l.b16 %v595
  %v667 = vunpack.c.l.b16 %v596
  %v668 = vunpack.c.l.b16 %v597
  %v669 = vunpack.c.l.b16 %v598
  %v670 = vunpack.c.l.b16 %v599
  %v671 = vunpack.c.l.b16 %v600
  %v672 = vunpack.c.l.b16 %v601
  %v673 = vunpack.c.l.b16 %v602
  %v674 = vunpack.c.l.b16 %v603
  %v675 = vunpack.c.l.b16 %v604
  %v676 = vunpack.c.l.b16 %v605
  %v677 = vunpack.c.l.b16 %v606
  %v678 = vunpack.c.l.b16 %v607
  %v679 = vunpack.c.l.b16 %v608
  %v680 = vunpack.c.l.b16 %v609
  %v681 = vunpack.c.l.b16 %v610
  %v682 = vpack.c.b16 %v651, %v650
  %v683 = vpack.c.b16 %v653, %v652
  %v684 = vpack.c.b16 %v655, %v654
  %v685 = vpack.c.b16 %v657, %v656
  %v686 = vpack.c.b16 %v659, %v658
  %v687 = vpack.c.b16 %v661, %v660
  %v688 = vpack.c.b16 %v663, %v662
  %v689 = vpack.c.b16 %v665, %v664
  %v690 = vpack.c.b16 %v667, %v666
  %v691 = vpack.c.b16 %v669, %v668
  %v692 = vpack.c.b16 %v671, %v670
  %v693 = vpack.c.b16 %v673, %v672
  %v694 = vpack.c.b16 %v675, %v674
  %v695 = vpack.c.b16 %v677, %v676
  %v696 = vpack.c.b16 %v679, %v678
  %v697 = vpack.c.b16 %v681, %v680
  %714 = vmatprep.subr.bf16.mxu0 0
  %715 = vmatpush1.bf16.msra.mxu0 %v682
  %716 = vmatprep.subr.bf16.mxu0 0
  %717 = vmatpush1.bf16.msra.mxu0 %v683
  %718 = vmatprep.subr.bf16.mxu0 0
  %719 = vmatpush1.bf16.msra.mxu0 %v684
  %720 = vmatprep.subr.bf16.mxu0 0
  %721 = vmatpush1.bf16.msra.mxu0 %v685
  %722 = vmatprep.subr.bf16.mxu0 0
  %723 = vmatpush1.bf16.msra.mxu0 %v686
  %724 = vmatprep.subr.bf16.mxu0 0
  %725 = vmatpush1.bf16.msra.mxu0 %v687
  %726 = vmatprep.subr.bf16.mxu0 0
  %727 = vmatpush1.bf16.msra.mxu0 %v688
  %728 = vmatprep.subr.bf16.mxu0 0
  %729 = vmatpush1.bf16.msra.mxu0 %v689
  %730 = vmatprep.subr.bf16.mxu0 0
  %731 = vmatpush1.bf16.msra.mxu0 %v690
  %732 = vmatprep.subr.bf16.mxu0 0
  %733 = vmatpush1.bf16.msra.mxu0 %v691
  %734 = vmatprep.subr.bf16.mxu0 0
  %735 = vmatpush1.bf16.msra.mxu0 %v692
  %736 = vmatprep.subr.bf16.mxu0 0
  %737 = vmatpush1.bf16.msra.mxu0 %v693
  %738 = vmatprep.subr.bf16.mxu0 0
  %739 = vmatpush1.bf16.msra.mxu0 %v694
  %740 = vmatprep.subr.bf16.mxu0 0
  %741 = vmatpush1.bf16.msra.mxu0 %v695
  %742 = vmatprep.subr.bf16.mxu0 0
  %743 = vmatpush1.bf16.msra.mxu0 %v696
  %744 = vmatprep.subr.bf16.mxu0 0
  %745 = vmatpush1.bf16.msra.mxu0 %v697
  %746 = vmatprep.mubr.bf16.mxu0 %v576
  %747 = vmatmul.mubr.bf16.gmra.mrb[0].mxu0 %v575
  %v748 = vpop.f32.mrb[0].mxu0
  %v749 = vadd.f32 %v616, %v748
  %v750 = vpop.f32.mrb[0].mxu0
  %v751 = vpop.f32.mrb[0].mxu0
  %v752 = vadd.f32 %v616, %v751
  %v753 = vpop.f32.mrb[0].mxu0
  %754 = vmatprep.mubr.bf16.mxu0 %v578
  %755 = vmatmul.mubr.bf16.gmra.mrb[0].mxu0 %v577
  %v756 = vpop.f32.mrb[0].mxu0
  %v757 = vadd.f32 %v616, %v756
  %v758 = vpop.f32.mrb[0].mxu0
  %v759 = vpop.f32.mrb[0].mxu0
  %v760 = vadd.f32 %v616, %v759
  %v761 = vpop.f32.mrb[0].mxu0
  %762 = vdwg.mxu0
  loop: start=0, step=1, limit=4
  $region62: #{gat_gcn_forward.1} parent=0 // loop_pre_header
    _
  $region63: #{gat_gcn_forward.1} parent=0 // loop_header
    %s764 = sphi 0, %s768
    %p765 = scmp.ge.s32.totalorder %s764, 4
  $region64: #{gat_gcn_forward.1} parent=0 // loop_header_branch
    %767 = sbr.rel (%p765) target = $region68
  $region65: #{gat_gcn_forward.1} parent=0 // loop_body
    %v769 = vld [vmem:[%s2] sm:$0xff]
    %v770 = vld [vmem:[%s2 + $0x8] sm:$0xff]
    %v771 = vld [vmem:[%s2 + $0x10] sm:$0xff]
    %v772 = vld [vmem:[%s2 + $0x18] sm:$0xff]
    %v773 = vstv %s764
    %vm774 = vcmp.eq.s32.totalorder %v769, %v773
    %vm775 = vcmp.eq.s32.totalorder %v770, %v773
    %vm776 = vcmp.eq.s32.totalorder %v771, %v773
    %vm777 = vcmp.eq.s32.totalorder %v772, %v773
    %v778 = vsel %vm774, 1, 0
    %v779 = vsel %vm775, 1, 0
    %v780 = vsel %vm776, 1, 0
    %v781 = vsel %vm777, 1, 0
    %782 = vset.pattern.permute.xlu0 0
    %783 = vperm.xlu0 %782, %v778
    %v784 = vpop.permute.xlu0 %783
    %785 = vset.pattern.permute.xlu0 0
    %786 = vperm.xlu0 %785, %v779
    %v787 = vpop.permute.xlu0 %786
    %788 = vset.pattern.permute.xlu0 0
    %789 = vperm.xlu0 %788, %v780
    %v790 = vpop.permute.xlu0 %789
    %791 = vset.pattern.permute.xlu0 0
    %792 = vperm.xlu0 %791, %v781
    %v793 = vpop.permute.xlu0 %792
    %vm794 = vcmp.eq.s32.totalorder %v784, 1
    %vm795 = vcmp.eq.s32.totalorder %v787, 1
    %vm796 = vcmp.eq.s32.totalorder %v790, 1
    %vm797 = vcmp.eq.s32.totalorder %v793, 1
    %v798 = vsel %vm794, %v749, -1e+30
    %v799 = vsel %vm795, %v752, -1e+30
    %v800 = vsel %vm796, %v757, -1e+30
    %v801 = vsel %vm797, %v760, -1e+30
    %v802 = vmax.f32 %v798, %v799
    %v803 = vmax.f32 %v800, %v801
    %v804 = vmax.f32 %v802, %v803
    %v805 = vrot.slane %v804, 4
    %v806 = vmax.f32 %v804, %v805
    %v807 = vrot.slane %v806, 2
    %v808 = vmax.f32 %v806, %v807
    %v809 = vrot.slane %v808, 1
    %v810 = vmax.f32 %v808, %v809
    %s811 = scalar_lea.vmem [#allocation2], %s764
    %812 = vst [vmem:[%s811] sm:$0x1] %v810
  $region66: #{gat_gcn_forward.1} parent=0 // loop_footer
    %s768 = sadd.s32 1, %s764
  $region67: #{gat_gcn_forward.1} parent=0 // loop_footer_branch
    %763 = sbr.rel target = $region63
  $region68: #{gat_gcn_forward.1} parent=0 // loop_exit
    _
  %v813 = vld [vmem:[#allocation2] sm:$0xf]
  %v814 = vpack.c.bf16 %v813, %v813
  %v815 = vld [vmem:[%s7] sm:$0xf]
  %v816 = vld [vmem:[%s7 + $0x4] sm:$0xf]
  %v817 = vld [vmem:[%s7 + $0x8] sm:$0xf]
  %v818 = vld [vmem:[%s7 + $0xc] sm:$0xf]
  %v819 = vld [vmem:[%s7 + $0x10] sm:$0xf]
  %v820 = vld [vmem:[%s7 + $0x14] sm:$0xf]
  %v821 = vld [vmem:[%s7 + $0x18] sm:$0xf]
  %v822 = vld [vmem:[%s7 + $0x1c] sm:$0xf]
  %v823 = vld [vmem:[%s7 + $0x20] sm:$0xf]
  %v824 = vld [vmem:[%s7 + $0x24] sm:$0xf]
  %v825 = vld [vmem:[%s7 + $0x28] sm:$0xf]
  %v826 = vld [vmem:[%s7 + $0x2c] sm:$0xf]
  %v827 = vld [vmem:[%s7 + $0x30] sm:$0xf]
  %v828 = vld [vmem:[%s7 + $0x34] sm:$0xf]
  %v829 = vld [vmem:[%s7 + $0x38] sm:$0xf]
  %v830 = vld [vmem:[%s7 + $0x3c] sm:$0xf]
  %v831 = vld [vmem:[%s14 + $0x9] sm:$0x1]
  %v833 = vlaneseq
  %v834 = vshrl.u32 %v833, 7
  %v835 = vsub.s32 0, %v834
  %v836 = vrot.slane %v831, %v835
  %v854 = vunpack.c.l.b16 %v815
  %v855 = vunpack.c.l.b16 %v816
  %v856 = vunpack.c.l.b16 %v817
  %v857 = vunpack.c.l.b16 %v818
  %v858 = vunpack.c.l.b16 %v819
  %v859 = vunpack.c.l.b16 %v820
  %v860 = vunpack.c.l.b16 %v821
  %v861 = vunpack.c.l.b16 %v822
  %v862 = vunpack.c.l.b16 %v823
  %v863 = vunpack.c.l.b16 %v824
  %v864 = vunpack.c.l.b16 %v825
  %v865 = vunpack.c.l.b16 %v826
  %v866 = vunpack.c.l.b16 %v827
  %v867 = vunpack.c.l.b16 %v828
  %v868 = vunpack.c.l.b16 %v829
  %v869 = vunpack.c.l.b16 %v830
  %v870 = vpack.c.b16 %v855, %v854
  %v871 = vpack.c.b16 %v857, %v856
  %v872 = vpack.c.b16 %v859, %v858
  %v873 = vpack.c.b16 %v861, %v860
  %v874 = vpack.c.b16 %v863, %v862
  %v875 = vpack.c.b16 %v865, %v864
  %v876 = vpack.c.b16 %v867, %v866
  %v877 = vpack.c.b16 %v869, %v868
  %886 = vmatprep.subr.bf16.mxu0 0
  %887 = vmatpush1.bf16.msra.mxu0 %v870
  %888 = vmatprep.subr.bf16.mxu0 0
  %889 = vmatpush1.bf16.msra.mxu0 %v871
  %890 = vmatprep.subr.bf16.mxu0 0
  %891 = vmatpush1.bf16.msra.mxu0 %v872
  %892 = vmatprep.subr.bf16.mxu0 0
  %893 = vmatpush1.bf16.msra.mxu0 %v873
  %894 = vmatprep.subr.bf16.mxu0 0
  %895 = vmatpush1.bf16.msra.mxu0 %v874
  %896 = vmatprep.subr.bf16.mxu0 0
  %897 = vmatpush1.bf16.msra.mxu0 %v875
  %898 = vmatprep.subr.bf16.mxu0 0
  %899 = vmatpush1.bf16.msra.mxu0 %v876
  %900 = vmatprep.subr.bf16.mxu0 0
  %901 = vmatpush1.bf16.msra.mxu0 %v877
  %902 = vmatprep.subr.bf16.mxu0 0
  %903 = vmatpush1.bf16.msra.mxu0 0
  %904 = vmatprep.subr.bf16.mxu0 0
  %905 = vmatpush1.bf16.msra.mxu0 0
  %906 = vmatprep.subr.bf16.mxu0 0
  %907 = vmatpush1.bf16.msra.mxu0 0
  %908 = vmatprep.subr.bf16.mxu0 0
  %909 = vmatpush1.bf16.msra.mxu0 0
  %910 = vmatprep.subr.bf16.mxu0 0
  %911 = vmatpush1.bf16.msra.mxu0 0
  %912 = vmatprep.subr.bf16.mxu0 0
  %913 = vmatpush1.bf16.msra.mxu0 0
  %914 = vmatprep.subr.bf16.mxu0 0
  %915 = vmatpush1.bf16.msra.mxu0 0
  %916 = vmatprep.subr.bf16.mxu0 0
  %917 = vmatpush1.bf16.msra.mxu0 0
  %918 = vmatprep.mubr.bf16.mxu0 0
  %919 = vmatmul.mubr.bf16.gmra.mrb[0].mxu0 %v814
  %v920 = vpop.f32.mrb[0].mxu0
  %v921 = vadd.f32 %v836, %v920
  %v922 = vpop.f32.mrb[0].mxu0
  %v923 = vpop.f32.mrb[0].mxu0
  %v924 = vpop.f32.mrb[0].mxu0
  %925 = vdwg.mxu0
  %v926 = vmax.f32 %v921, 0.0
  %v927 = vpack.c.bf16 %v926, %v926
  %v928 = vld [vmem:[%s8] sm:$0xf]
  %v929 = vld [vmem:[%s8 + $0x4] sm:$0xf]
  %v930 = vld [vmem:[%s8 + $0x8] sm:$0xf]
  %v931 = vld [vmem:[%s8 + $0xc] sm:$0xf]
  %v932 = vld [vmem:[%s8 + $0x10] sm:$0xf]
  %v933 = vld [vmem:[%s8 + $0x14] sm:$0xf]
  %v934 = vld [vmem:[%s8 + $0x18] sm:$0xf]
  %v935 = vld [vmem:[%s8 + $0x1c] sm:$0xf]
  %v936 = vld [vmem:[%s14 + $0xa] sm:$0x1]
  %v938 = vlaneseq
  %v939 = vshrl.u32 %v938, 7
  %v940 = vsub.s32 0, %v939
  %v941 = vrot.slane %v936, %v940
  %v951 = vunpack.c.l.b16 %v928
  %v952 = vunpack.c.l.b16 %v929
  %v953 = vunpack.c.l.b16 %v930
  %v954 = vunpack.c.l.b16 %v931
  %v955 = vunpack.c.l.b16 %v932
  %v956 = vunpack.c.l.b16 %v933
  %v957 = vunpack.c.l.b16 %v934
  %v958 = vunpack.c.l.b16 %v935
  %v959 = vpack.c.b16 %v952, %v951
  %v960 = vpack.c.b16 %v954, %v953
  %v961 = vpack.c.b16 %v956, %v955
  %v962 = vpack.c.b16 %v958, %v957
  %vm967 = vcmask 523264
  %v969 = vsel %vm967, %v927, 0
  %971 = vmatprep.subr.bf16.mxu0 0
  %972 = vmatpush1.bf16.msra.mxu0 %v959
  %973 = vmatprep.subr.bf16.mxu0 0
  %974 = vmatpush1.bf16.msra.mxu0 %v960
  %975 = vmatprep.subr.bf16.mxu0 0
  %976 = vmatpush1.bf16.msra.mxu0 %v961
  %977 = vmatprep.subr.bf16.mxu0 0
  %978 = vmatpush1.bf16.msra.mxu0 %v962
  %979 = vmatprep.subr.bf16.mxu0 0
  %980 = vmatpush1.bf16.msra.mxu0 0
  %981 = vmatprep.subr.bf16.mxu0 0
  %982 = vmatpush1.bf16.msra.mxu0 0
  %983 = vmatprep.subr.bf16.mxu0 0
  %984 = vmatpush1.bf16.msra.mxu0 0
  %985 = vmatprep.subr.bf16.mxu0 0
  %986 = vmatpush1.bf16.msra.mxu0 0
  %987 = vmatprep.subr.bf16.mxu0 0
  %988 = vmatpush1.bf16.msra.mxu0 0
  %989 = vmatprep.subr.bf16.mxu0 0
  %990 = vmatpush1.bf16.msra.mxu0 0
  %991 = vmatprep.subr.bf16.mxu0 0
  %992 = vmatpush1.bf16.msra.mxu0 0
  %993 = vmatprep.subr.bf16.mxu0 0
  %994 = vmatpush1.bf16.msra.mxu0 0
  %995 = vmatprep.subr.bf16.mxu0 0
  %996 = vmatpush1.bf16.msra.mxu0 0
  %997 = vmatprep.subr.bf16.mxu0 0
  %998 = vmatpush1.bf16.msra.mxu0 0
  %999 = vmatprep.subr.bf16.mxu0 0
  %1000 = vmatpush1.bf16.msra.mxu0 0
  %1001 = vmatprep.subr.bf16.mxu0 0
  %1002 = vmatpush1.bf16.msra.mxu0 0
  %1003 = vmatprep.mubr.bf16.mxu0 0
  %1004 = vmatmul.mubr.bf16.gmra.mrb[0].mxu0 %v969
  %v1005 = vpop.f32.mrb[0].mxu0
  %v1006 = vadd.f32 %v941, %v1005
  %v1007 = vpop.f32.mrb[0].mxu0
  %v1008 = vpop.f32.mrb[0].mxu0
  %v1009 = vpop.f32.mrb[0].mxu0
  %1010 = vdwg.mxu0
  %v1011 = vmax.f32 %v1006, 0.0
  %v1012 = vld [vmem:[%s3] sm:$0x3]
  %v1013 = vld [vmem:[%s9] sm:$0xf]
  %v1014 = vld [vmem:[%s9 + $0x4] sm:$0xf]
  %v1015 = vld [vmem:[%s9 + $0x8] sm:$0xf]
  %v1016 = vld [vmem:[%s9 + $0xc] sm:$0xf]
  %v1017 = vld [vmem:[%s14 + $0xb] sm:$0x1]
  %v1019 = vlaneseq
  %v1020 = vshrl.u32 %v1019, 7
  %v1021 = vsub.s32 0, %v1020
  %v1022 = vrot.slane %v1017, %v1021
  %v1028 = vunpack.c.l.b16 %v1013
  %v1029 = vunpack.c.l.b16 %v1014
  %v1030 = vunpack.c.l.b16 %v1015
  %v1031 = vunpack.c.l.b16 %v1016
  %v1032 = vpack.c.b16 %v1029, %v1028
  %v1033 = vpack.c.b16 %v1031, %v1030
  %v1037 = vsel %vm101, %v1012, 0
  %1039 = vmatprep.subr.bf16.mxu0 0
  %1040 = vmatpush1.bf16.msra.mxu0 %v1032
  %1041 = vmatprep.subr.bf16.mxu0 0
  %1042 = vmatpush1.bf16.msra.mxu0 %v1033
  %1043 = vmatprep.subr.bf16.mxu0 0
  %1044 = vmatpush1.bf16.msra.mxu0 0
  %1045 = vmatprep.subr.bf16.mxu0 0
  %1046 = vmatpush1.bf16.msra.mxu0 0
  %1047 = vmatprep.subr.bf16.mxu0 0
  %1048 = vmatpush1.bf16.msra.mxu0 0
  %1049 = vmatprep.subr.bf16.mxu0 0
  %1050 = vmatpush1.bf16.msra.mxu0 0
  %1051 = vmatprep.subr.bf16.mxu0 0
  %1052 = vmatpush1.bf16.msra.mxu0 0
  %1053 = vmatprep.subr.bf16.mxu0 0
  %1054 = vmatpush1.bf16.msra.mxu0 0
  %1055 = vmatprep.subr.bf16.mxu0 0
  %1056 = vmatpush1.bf16.msra.mxu0 0
  %1057 = vmatprep.subr.bf16.mxu0 0
  %1058 = vmatpush1.bf16.msra.mxu0 0
  %1059 = vmatprep.subr.bf16.mxu0 0
  %1060 = vmatpush1.bf16.msra.mxu0 0
  %1061 = vmatprep.subr.bf16.mxu0 0
  %1062 = vmatpush1.bf16.msra.mxu0 0
  %1063 = vmatprep.subr.bf16.mxu0 0
  %1064 = vmatpush1.bf16.msra.mxu0 0
  %1065 = vmatprep.subr.bf16.mxu0 0
  %1066 = vmatpush1.bf16.msra.mxu0 0
  %1067 = vmatprep.subr.bf16.mxu0 0
  %1068 = vmatpush1.bf16.msra.mxu0 0
  %1069 = vmatprep.subr.bf16.mxu0 0
  %1070 = vmatpush1.bf16.msra.mxu0 0
  %1071 = vmatprep.mubr.bf16.mxu0 0
  %1072 = vmatmul.mubr.bf16.gmra.mrb[0].mxu0 %v1037
  %v1073 = vpop.f32.mrb[0].mxu0
  %v1074 = vadd.f32 %v1022, %v1073
  %v1075 = vpop.f32.mrb[0].mxu0
  %v1076 = vpop.f32.mrb[0].mxu0
  %v1077 = vpop.f32.mrb[0].mxu0
  %1078 = vdwg.mxu0
  %v1079 = vmax.f32 %v1074, 0.0
  %v1080 = vpack.c.bf16 %v1011, %v1011
  %v1081 = vld [vmem:[%s10] sm:$0xf]
  %v1082 = vld [vmem:[%s10 + $0x4] sm:$0xf]
  %v1083 = vld [vmem:[%s10 + $0x8] sm:$0xf]
  %v1084 = vld [vmem:[%s10 + $0xc] sm:$0xf]
  %v1085 = vpack.c.bf16 %v1079, %v1079
  %v1086 = vld [vmem:[%s11] sm:$0xf]
  %v1087 = vld [vmem:[%s11 + $0x4] sm:$0xf]
  %v1088 = vld [vmem:[%s11 + $0x8] sm:$0xf]
  %v1089 = vld [vmem:[%s11 + $0xc] sm:$0xf]
  %v1090 = vld [vmem:[%s11 + $0x10] sm:$0xf]
  %v1091 = vld [vmem:[%s11 + $0x14] sm:$0xf]
  %v1092 = vld [vmem:[%s11 + $0x18] sm:$0xf]
  %v1093 = vld [vmem:[%s11 + $0x1c] sm:$0xf]
  %v1102 = vunpack.c.l.b16 %v1086
  %v1103 = vunpack.c.l.b16 %v1087
  %v1104 = vunpack.c.l.b16 %v1088
  %v1105 = vunpack.c.l.b16 %v1089
  %v1106 = vunpack.c.l.b16 %v1090
  %v1107 = vunpack.c.l.b16 %v1091
  %v1108 = vunpack.c.l.b16 %v1092
  %v1109 = vunpack.c.l.b16 %v1093
  %v1110 = vpack.c.b16 %v1103, %v1102
  %v1111 = vpack.c.b16 %v1105, %v1104
  %v1112 = vpack.c.b16 %v1107, %v1106
  %v1113 = vpack.c.b16 %v1109, %v1108
  %v1119 = vsel %vm967, %v1085, 0
  %1121 = vmatprep.subr.bf16.mxu0 0
  %1122 = vmatpush1.bf16.msra.mxu0 %v1110
  %1123 = vmatprep.subr.bf16.mxu0 0
  %1124 = vmatpush1.bf16.msra.mxu0 %v1111
  %1125 = vmatprep.subr.bf16.mxu0 0
  %1126 = vmatpush1.bf16.msra.mxu0 %v1112
  %1127 = vmatprep.subr.bf16.mxu0 0
  %1128 = vmatpush1.bf16.msra.mxu0 %v1113
  %1129 = vmatprep.subr.bf16.mxu0 0
  %1130 = vmatpush1.bf16.msra.mxu0 0
  %1131 = vmatprep.subr.bf16.mxu0 0
  %1132 = vmatpush1.bf16.msra.mxu0 0
  %1133 = vmatprep.subr.bf16.mxu0 0
  %1134 = vmatpush1.bf16.msra.mxu0 0
  %1135 = vmatprep.subr.bf16.mxu0 0
  %1136 = vmatpush1.bf16.msra.mxu0 0
  %1137 = vmatprep.subr.bf16.mxu0 0
  %1138 = vmatpush1.bf16.msra.mxu0 0
  %1139 = vmatprep.subr.bf16.mxu0 0
  %1140 = vmatpush1.bf16.msra.mxu0 0
  %1141 = vmatprep.subr.bf16.mxu0 0
  %1142 = vmatpush1.bf16.msra.mxu0 0
  %1143 = vmatprep.subr.bf16.mxu0 0
  %1144 = vmatpush1.bf16.msra.mxu0 0
  %1145 = vmatprep.subr.bf16.mxu0 0
  %1146 = vmatpush1.bf16.msra.mxu0 0
  %1147 = vmatprep.subr.bf16.mxu0 0
  %1148 = vmatpush1.bf16.msra.mxu0 0
  %1149 = vmatprep.subr.bf16.mxu0 0
  %1150 = vmatpush1.bf16.msra.mxu0 0
  %1151 = vmatprep.subr.bf16.mxu0 0
  %1152 = vmatpush1.bf16.msra.mxu0 0
  %1153 = vmatprep.mubr.bf16.mxu0 0
  %1154 = vmatmul.mubr.bf16.gmra.mrb[0].mxu0 %v1119
  %v1155 = vpop.f32.mrb[0].mxu0
  %v1156 = vadd.f32 0.0, %v1155
  %v1157 = vpop.f32.mrb[0].mxu0
  %v1158 = vpop.f32.mrb[0].mxu0
  %v1159 = vpop.f32.mrb[0].mxu0
  %1160 = vdwg.mxu0
  %v1165 = vunpack.c.l.b16 %v1081
  %v1166 = vunpack.c.l.b16 %v1082
  %v1167 = vunpack.c.l.b16 %v1083
  %v1168 = vunpack.c.l.b16 %v1084
  %v1169 = vpack.c.b16 %v1166, %v1165
  %v1170 = vpack.c.b16 %v1168, %v1167
  %v1174 = vsel %vm101, %v1080, 0
  %1176 = vmatprep.subr.bf16.mxu0 0
  %1177 = vmatpush1.bf16.msra.mxu0 %v1169
  %1178 = vmatprep.subr.bf16.mxu0 0
  %1179 = vmatpush1.bf16.msra.mxu0 %v1170
  %1180 = vmatprep.subr.bf16.mxu0 0
  %1181 = vmatpush1.bf16.msra.mxu0 0
  %1182 = vmatprep.subr.bf16.mxu0 0
  %1183 = vmatpush1.bf16.msra.mxu0 0
  %1184 = vmatprep.subr.bf16.mxu0 0
  %1185 = vmatpush1.bf16.msra.mxu0 0
  %1186 = vmatprep.subr.bf16.mxu0 0
  %1187 = vmatpush1.bf16.msra.mxu0 0
  %1188 = vmatprep.subr.bf16.mxu0 0
  %1189 = vmatpush1.bf16.msra.mxu0 0
  %1190 = vmatprep.subr.bf16.mxu0 0
  %1191 = vmatpush1.bf16.msra.mxu0 0
  %1192 = vmatprep.subr.bf16.mxu0 0
  %1193 = vmatpush1.bf16.msra.mxu0 0
  %1194 = vmatprep.subr.bf16.mxu0 0
  %1195 = vmatpush1.bf16.msra.mxu0 0
  %1196 = vmatprep.subr.bf16.mxu0 0
  %1197 = vmatpush1.bf16.msra.mxu0 0
  %1198 = vmatprep.subr.bf16.mxu0 0
  %1199 = vmatpush1.bf16.msra.mxu0 0
  %1200 = vmatprep.subr.bf16.mxu0 0
  %1201 = vmatpush1.bf16.msra.mxu0 0
  %1202 = vmatprep.subr.bf16.mxu0 0
  %1203 = vmatpush1.bf16.msra.mxu0 0
  %1204 = vmatprep.subr.bf16.mxu0 0
  %1205 = vmatpush1.bf16.msra.mxu0 0
  %1206 = vmatprep.subr.bf16.mxu0 0
  %1207 = vmatpush1.bf16.msra.mxu0 0
  %1208 = vmatprep.mubr.bf16.mxu0 0
  %1209 = vmatmul.mubr.bf16.gmra.mrb[0].mxu0 %v1174
  %v1210 = vpop.f32.mrb[0].mxu0
  %v1211 = vadd.f32 %v1156, %v1210
  %v1212 = vpop.f32.mrb[0].mxu0
  %v1213 = vpop.f32.mrb[0].mxu0
  %v1214 = vpop.f32.mrb[0].mxu0
  %1215 = vdwg.mxu0
  %v1216 = vld [vmem:[%s14 + $0xc] sm:$0x1]
  %v1218 = vlaneseq
  %v1219 = vshrl.u32 %v1218, 7
  %v1220 = vsub.s32 0, %v1219
  %v1221 = vrot.slane %v1216, %v1220
  %v1223 = vadd.f32 %v1211, %v1221
  %v1224 = vpack.c.bf16 %v1223, %v1223
  %v1225 = vld [vmem:[%s12] sm:$0xf]
  %v1226 = vld [vmem:[%s12 + $0x4] sm:$0xf]
  %v1227 = vld [vmem:[%s12 + $0x8] sm:$0xf]
  %v1228 = vld [vmem:[%s12 + $0xc] sm:$0xf]
  %v1229 = vld [vmem:[%s12 + $0x10] sm:$0xf]
  %v1230 = vld [vmem:[%s12 + $0x14] sm:$0xf]
  %v1231 = vld [vmem:[%s12 + $0x18] sm:$0xf]
  %v1232 = vld [vmem:[%s12 + $0x1c] sm:$0xf]
  %v1233 = vld [vmem:[%s12 + $0x20] sm:$0xf]
  %v1234 = vld [vmem:[%s12 + $0x24] sm:$0xf]
  %v1235 = vld [vmem:[%s12 + $0x28] sm:$0xf]
  %v1236 = vld [vmem:[%s12 + $0x2c] sm:$0xf]
  %v1237 = vld [vmem:[%s12 + $0x30] sm:$0xf]
  %v1238 = vld [vmem:[%s12 + $0x34] sm:$0xf]
  %v1239 = vld [vmem:[%s12 + $0x38] sm:$0xf]
  %v1240 = vld [vmem:[%s12 + $0x3c] sm:$0xf]
  %v1241 = vld [vmem:[%s14 + $0xd] sm:$0x1]
  %v1243 = vlaneseq
  %v1244 = vshrl.u32 %v1243, 7
  %v1245 = vsub.s32 0, %v1244
  %v1246 = vrot.slane %v1241, %v1245
  %v1264 = vunpack.c.l.b16 %v1225
  %v1265 = vunpack.c.l.b16 %v1226
  %v1266 = vunpack.c.l.b16 %v1227
  %v1267 = vunpack.c.l.b16 %v1228
  %v1268 = vunpack.c.l.b16 %v1229
  %v1269 = vunpack.c.l.b16 %v1230
  %v1270 = vunpack.c.l.b16 %v1231
  %v1271 = vunpack.c.l.b16 %v1232
  %v1272 = vunpack.c.l.b16 %v1233
  %v1273 = vunpack.c.l.b16 %v1234
  %v1274 = vunpack.c.l.b16 %v1235
  %v1275 = vunpack.c.l.b16 %v1236
  %v1276 = vunpack.c.l.b16 %v1237
  %v1277 = vunpack.c.l.b16 %v1238
  %v1278 = vunpack.c.l.b16 %v1239
  %v1279 = vunpack.c.l.b16 %v1240
  %v1280 = vpack.c.b16 %v1265, %v1264
  %v1281 = vpack.c.b16 %v1267, %v1266
  %v1282 = vpack.c.b16 %v1269, %v1268
  %v1283 = vpack.c.b16 %v1271, %v1270
  %v1284 = vpack.c.b16 %v1273, %v1272
  %v1285 = vpack.c.b16 %v1275, %v1274
  %v1286 = vpack.c.b16 %v1277, %v1276
  %v1287 = vpack.c.b16 %v1279, %v1278
  %1296 = vmatprep.subr.bf16.mxu0 0
  %1297 = vmatpush1.bf16.msra.mxu0 %v1280
  %1298 = vmatprep.subr.bf16.mxu0 0
  %1299 = vmatpush1.bf16.msra.mxu0 %v1281
  %1300 = vmatprep.subr.bf16.mxu0 0
  %1301 = vmatpush1.bf16.msra.mxu0 %v1282
  %1302 = vmatprep.subr.bf16.mxu0 0
  %1303 = vmatpush1.bf16.msra.mxu0 %v1283
  %1304 = vmatprep.subr.bf16.mxu0 0
  %1305 = vmatpush1.bf16.msra.mxu0 %v1284
  %1306 = vmatprep.subr.bf16.mxu0 0
  %1307 = vmatpush1.bf16.msra.mxu0 %v1285
  %1308 = vmatprep.subr.bf16.mxu0 0
  %1309 = vmatpush1.bf16.msra.mxu0 %v1286
  %1310 = vmatprep.subr.bf16.mxu0 0
  %1311 = vmatpush1.bf16.msra.mxu0 %v1287
  %1312 = vmatprep.subr.bf16.mxu0 0
  %1313 = vmatpush1.bf16.msra.mxu0 0
  %1314 = vmatprep.subr.bf16.mxu0 0
  %1315 = vmatpush1.bf16.msra.mxu0 0
  %1316 = vmatprep.subr.bf16.mxu0 0
  %1317 = vmatpush1.bf16.msra.mxu0 0
  %1318 = vmatprep.subr.bf16.mxu0 0
  %1319 = vmatpush1.bf16.msra.mxu0 0
  %1320 = vmatprep.subr.bf16.mxu0 0
  %1321 = vmatpush1.bf16.msra.mxu0 0
  %1322 = vmatprep.subr.bf16.mxu0 0
  %1323 = vmatpush1.bf16.msra.mxu0 0
  %1324 = vmatprep.subr.bf16.mxu0 0
  %1325 = vmatpush1.bf16.msra.mxu0 0
  %1326 = vmatprep.subr.bf16.mxu0 0
  %1327 = vmatpush1.bf16.msra.mxu0 0
  %1328 = vmatprep.mubr.bf16.mxu0 0
  %1329 = vmatmul.mubr.bf16.gmra.mrb[0].mxu0 %v1224
  %v1330 = vpop.f32.mrb[0].mxu0
  %v1331 = vadd.f32 %v1246, %v1330
  %v1332 = vpop.f32.mrb[0].mxu0
  %v1333 = vpop.f32.mrb[0].mxu0
  %v1334 = vpop.f32.mrb[0].mxu0
  %1335 = vdwg.mxu0
  %v1336 = vmax.f32 %v1331, 0.0
  %v1337 = vpack.c.bf16 %v1336, %v1336
  %v1338 = vld [vmem:[%s13] sm:$0xf]
  %v1339 = vld [vmem:[%s13 + $0x4] sm:$0xf]
  %v1340 = vld [vmem:[%s13 + $0x8] sm:$0xf]
  %v1341 = vld [vmem:[%s13 + $0xc] sm:$0xf]
  %v1342 = vld [vmem:[%s14 + $0xe] sm:$0x1]
  %v1344 = vlaneseq
  %v1345 = vshrl.u32 %v1344, 7
  %v1346 = vsub.s32 0, %v1345
  %v1347 = vrot.slane %v1342, %v1346
  %v1353 = vunpack.c.l.b16 %v1338
  %v1354 = vunpack.c.l.b16 %v1339
  %v1355 = vunpack.c.l.b16 %v1340
  %v1356 = vunpack.c.l.b16 %v1341
  %v1357 = vpack.c.b16 %v1354, %v1353
  %v1358 = vpack.c.b16 %v1356, %v1355
  %v1362 = vsel %vm101, %v1337, 0
  %1364 = vmatprep.subr.bf16.mxu0 0
  %1365 = vmatpush1.bf16.msra.mxu0 %v1357
  %1366 = vmatprep.subr.bf16.mxu0 0
  %1367 = vmatpush1.bf16.msra.mxu0 %v1358
  %1368 = vmatprep.subr.bf16.mxu0 0
  %1369 = vmatpush1.bf16.msra.mxu0 0
  %1370 = vmatprep.subr.bf16.mxu0 0
  %1371 = vmatpush1.bf16.msra.mxu0 0
  %1372 = vmatprep.subr.bf16.mxu0 0
  %1373 = vmatpush1.bf16.msra.mxu0 0
  %1374 = vmatprep.subr.bf16.mxu0 0
  %1375 = vmatpush1.bf16.msra.mxu0 0
  %1376 = vmatprep.subr.bf16.mxu0 0
  %1377 = vmatpush1.bf16.msra.mxu0 0
  %1378 = vmatprep.subr.bf16.mxu0 0
  %1379 = vmatpush1.bf16.msra.mxu0 0
  %1380 = vmatprep.subr.bf16.mxu0 0
  %1381 = vmatpush1.bf16.msra.mxu0 0
  %1382 = vmatprep.subr.bf16.mxu0 0
  %1383 = vmatpush1.bf16.msra.mxu0 0
  %1384 = vmatprep.subr.bf16.mxu0 0
  %1385 = vmatpush1.bf16.msra.mxu0 0
  %1386 = vmatprep.subr.bf16.mxu0 0
  %1387 = vmatpush1.bf16.msra.mxu0 0
  %1388 = vmatprep.subr.bf16.mxu0 0
  %1389 = vmatpush1.bf16.msra.mxu0 0
  %1390 = vmatprep.subr.bf16.mxu0 0
  %1391 = vmatpush1.bf16.msra.mxu0 0
  %1392 = vmatprep.subr.bf16.mxu0 0
  %1393 = vmatpush1.bf16.msra.mxu0 0
  %1394 = vmatprep.subr.bf16.mxu0 0
  %1395 = vmatpush1.bf16.msra.mxu0 0
  %1396 = vmatprep.mubr.bf16.mxu0 0
  %1397 = vmatmul.mubr.bf16.gmra.mrb[0].mxu0 %v1362
  %v1398 = vpop.f32.mrb[0].mxu0
  %v1399 = vadd.f32 %v1347, %v1398
  %v1400 = vpop.f32.mrb[0].mxu0
  %v1401 = vpop.f32.mrb[0].mxu0
  %v1402 = vpop.f32.mrb[0].mxu0
  %1403 = vdwg.mxu0
  %1404 = vst [vmem:[%s15] sm:$0xf] %v1399
  // Predicated region
  $region69: #{gat_gcn_forward.1} parent=0 // pred_check
    _
  $region70: #{gat_gcn_forward.1} parent=0 // pred_check_branch
    %1406 = sbr.rel (0) target = $region72
  $region71: #{gat_gcn_forward.1} parent=0 // pred_region
    _
  $region72: #{gat_gcn_forward.1} parent=0 // pred_fallthru
    _
  // Predicated region
  $region73: #{gat_gcn_forward.1} parent=0 // pred_check
    _
  $region74: #{gat_gcn_forward.1} parent=0 // pred_check_branch
    %1408 = sbr.rel (0) target = $region76
  $region75: #{gat_gcn_forward.1} parent=0 // pred_region
    _
  $region76: #{gat_gcn_forward.1} parent=0 // pred_fallthru
    _

</llo_original>
